<compile_context>
chip_gen: v5e
topology: v5e:2x2
jax: 0.10.0
libtpu: 0.0.40
codegen_flags: <defaults>
</compile_context>

<pallas_src>
from functools import partial

import jax
import jax.numpy as jnp
from jax.experimental import pallas as pl
from jax.experimental.pallas import tpu as pltpu

BN_EPS = 1e-5
_BN_SCALE = 1.0 / (1.0 + BN_EPS) ** 0.5   # eval-mode BN fold with default running stats


# ---------------------------------------------------------------------------
# Fused kernel: maxpool(2x2) -> SepConv -> SepConv -> (+ 1x1 residual)
# ---------------------------------------------------------------------------

def _store_padded(pad_ref, interior):
    """Store `interior` into pad_ref[:, 1:-1, 1:-1, :]; zero ONLY the 1-wide halo ring."""
    b, hpad, wpad, c = pad_ref.shape
    hp, wp = hpad - 2, wpad - 2
    zrow = jnp.zeros((b, 1, wpad, c), jnp.float32)
    pad_ref[:, 0:1, :, :] = zrow                          # top halo row
    pad_ref[:, hp + 1:hpad, :, :] = zrow                  # bottom halo row
    zcol = jnp.zeros((b, hp, 1, c), jnp.float32)
    pad_ref[:, 1:hp + 1, 0:1, :] = zcol                   # left halo column
    pad_ref[:, 1:hp + 1, wp + 1:wpad, :] = zcol           # right halo column
    pad_ref[:, 1:hp + 1, 1:wp + 1, :] = interior          # interior, written once


def _depthwise3x3_bn_relu(pad_ref, dw_ref, bias_ref, hp, wp):
    """3x3 depthwise conv over the zero-padded scratch, folded-BN bias, ReLU.

    The three column shifts are materialized once each (direct loads from the ref);
    the row shifts are free leading-dim slices of those slabs.
    """
    dw = dw_ref[...]                                              # [9, C] (BN scale pre-folded)
    cols = [pad_ref[:, :, kj:kj + wp, :] for kj in range(3)]      # 3 x [B, Hp+2, Wp, C]
    acc = None
    for kj in range(3):
        ck = cols[kj]
        for ki in range(3):                                       # statically unrolled taps
            term = ck[:, ki:ki + hp, :, :] * dw[ki * 3 + kj]
            acc = term if acc is None else acc + term
    return jnp.maximum(acc + bias_ref[...], 0.0)


def _pointwise_bn_relu(t_flat, pw_ref, bias_ref):
    """1x1 conv as one [M, Cin] x [Cin, Cout] MXU matmul (bf16 operands, f32 acc), BN bias, ReLU."""
    y = jnp.dot(t_flat.astype(jnp.bfloat16), pw_ref[...],
                preferred_element_type=jnp.float32)
    return jnp.maximum(y + bias_ref[...], 0.0)


def _down_kernel(x_ref,
                 dw1_ref, b1d_ref, pw1_ref, b1p_ref,
                 dw2_ref, b2d_ref, pw2_ref, b2p_ref,
                 rw_ref,
                 o_ref,
                 pad1_ref, pad2_ref, *,
                 hp, wp, cin, cmid, cout):
    b = o_ref.shape[0]
    m = b * hp * wp

    # ---- 2x2 max pool, vectorized (input arrives as [B, H, Wp, 2*Cin]) ----
    x = x_ref[...].astype(jnp.float32)
    xv = jnp.max(x.reshape(b, hp, 2, wp, 2 * cin), axis=2)     # vertical pairs (leading dim)
    pooled = jnp.maximum(xv[..., :cin], xv[..., cin:])          # horizontal pairs (lane halves)

    # ---- SeparableConv2d #1: dw3x3 -> BN -> ReLU -> 1x1 -> BN -> ReLU ----
    _store_padded(pad1_ref, pooled)
    t1 = _depthwise3x3_bn_relu(pad1_ref, dw1_ref, b1d_ref, hp, wp)     # [B, Hp, Wp, Cin]
    h1 = _pointwise_bn_relu(t1.reshape(m, cin), pw1_ref, b1p_ref)      # [M, Cmid]

    # ---- SeparableConv2d #2 ----
    _store_padded(pad2_ref, h1.reshape(b, hp, wp, cmid))
    t2 = _depthwise3x3_bn_relu(pad2_ref, dw2_ref, b2d_ref, hp, wp)     # [B, Hp, Wp, Cmid]
    h2 = _pointwise_bn_relu(t2.reshape(m, cmid), pw2_ref, b2p_ref)     # [M, Cout]

    # ---- 1x1 residual conv on the pooled input (reuse the live `pooled` value), add ----
    res = jnp.dot(pooled.reshape(m, cin).astype(jnp.bfloat16), rw_ref[...],
                  preferred_element_type=jnp.float32)
    o_ref[...] = (res + h2).reshape(b, hp, wp, cout).astype(o_ref.dtype)


# ---------------------------------------------------------------------------
# pallas_call wrapper
# ---------------------------------------------------------------------------

def _rep_spec(shape):
    nd = len(shape)
    return pl.BlockSpec(shape, lambda i, _nd=nd: (0,) * _nd)


def down_pallas(x_nhwc, p, *, images_per_step=None):
    n, h, w, cin = x_nhwc.shape
    if h % 2 or w % 2:
        raise ValueError("down_pallas requires even H and W (MaxPool2d(2)).")
    hp, wp = h // 2, w // 2
    cmid = p["pw1"].shape[1]
    cout = p["pw2"].shape[1]

    # Host-side weight prep: fold BN scales into the conv weights (biases stay additive)
    # and pre-cast the MXU operands to bf16 so no per-step cast/scale happens in-kernel.
    dw1 = (p["dw1"] * p["s1d"]).astype(jnp.float32)
    pw1 = (p["pw1"] * p["s1p"]).astype(jnp.bfloat16)
    dw2 = (p["dw2"] * p["s2d"]).astype(jnp.float32)
    pw2 = (p["pw2"] * p["s2p"]).astype(jnp.bfloat16)
    rw = p["rw"].astype(jnp.bfloat16)
    weights = [dw1, p["b1d"], pw1, p["b1p"],
               dw2, p["b2d"], pw2, p["b2p"], rw]

    # Images per grid step: grow matmul M = b_tile*Hp*Wp toward the MXU edge when the
    # spatial dims are small (must divide N).
    if images_per_step is None:
        target = max(1, -(-256 // (hp * wp)))
        b_tile = 1
        for cand in range(1, n + 1):
            if n % cand == 0 and cand <= target:
                b_tile = cand
    else:
        if n % images_per_step:
            raise ValueError("images_per_step must divide the batch size")
        b_tile = images_per_step
    grid = (n // b_tile,)

    # Free row-major reshape: even/odd pool columns become the two lane halves.
    x2 = x_nhwc.reshape(n, h, wp, 2 * cin)

    # Cost / VMEM estimates.
    flops = 2 * n * hp * wp * (9 * cin + cin * cmid + 9 * cmid + cmid * cout + cin * cout)
    w_bytes = sum(int(wt.size) * wt.dtype.itemsize for wt in weights)
    bytes_accessed = 4 * int(x_nhwc.size) + 4 * n * hp * wp * cout + w_bytes

    in_block = 4 * b_tile * h * wp * 2 * cin
    out_block = 4 * b_tile * hp * wp * cout
    scratch_bytes = 4 * b_tile * (hp + 2) * (wp + 2) * (cin + cmid)
    live_bytes = 4 * 8 * b_tile * hp * wp * max(cin, cmid, cout)
    vmem_need = 2 * (in_block + out_block) + 2 * w_bytes + scratch_bytes + live_bytes
    vmem_limit = int(min(60 * 1024 * 1024, max(32 * 1024 * 1024, vmem_need)))

    kernel = partial(_down_kernel, hp=hp, wp=wp, cin=cin, cmid=cmid, cout=cout)

    return pl.pallas_call(
        kernel,
        grid=grid,
        in_specs=[pl.BlockSpec((b_tile, h, wp, 2 * cin), lambda i: (i, 0, 0, 0))]
                 + [_rep_spec(wt.shape) for wt in weights],
        out_specs=pl.BlockSpec((b_tile, hp, wp, cout), lambda i: (i, 0, 0, 0)),
        out_shape=jax.ShapeDtypeStruct((n, hp, wp, cout), jnp.float32),
        scratch_shapes=[pltpu.VMEM((b_tile, hp + 2, wp + 2, cin), jnp.float32),
                        pltpu.VMEM((b_tile, hp + 2, wp + 2, cmid), jnp.float32)],
        compiler_params=pltpu.CompilerParams(
            dimension_semantics=("parallel",),
            vmem_limit_bytes=vmem_limit),
        cost_estimate=pl.CostEstimate(flops=flops, transcendentals=0,
                                      bytes_accessed=bytes_accessed),
    )(x2, *weights)


def down_forward(x_nchw, params):
    """Down.forward: NCHW in -> NCHW out (channels = out_channels, spatial halved).

    For chained Down blocks prefer keeping activations NHWC and calling down_pallas
    directly: the transposes below are full-tensor HBM round trips done by XLA.
    """
    x = jnp.transpose(x_nchw.astype(jnp.float32), (0, 2, 3, 1))   # NCHW -> NHWC
    y = down_pallas(x, params)
    return jnp.transpose(y, (0, 3, 1, 2))                          # NHWC -> NCHW


# ---------------------------------------------------------------------------
# Deterministic parameter construction (shapes follow the PyTorch __init__)
# ---------------------------------------------------------------------------

def _conv_uniform(key, shape, fan_in):
    bound = 1.0 / (fan_in ** 0.5)
    return jax.random.uniform(key, shape, jnp.float32, -bound, bound)


def make_down_params(key, in_channels, out_channels, mid_channels=None):
    cmid = out_channels if mid_channels is None else mid_channels
    k = jax.random.split(key, 5)

    def bn(c):   # eval-mode BN with default running stats, folded to (scale, bias)
        return (jnp.full((1, c), _BN_SCALE, jnp.float32), jnp.zeros((1, c), jnp.float32))

    s1d, b1d = bn(in_channels)
    s1p, b1p = bn(cmid)
    s2d, b2d = bn(cmid)
    s2p, b2p = bn(out_channels)
    return dict(
        dw1=_conv_uniform(k[0], (9, in_channels), fan_in=9),            # depthwise 3x3, bias=False
        pw1=_conv_uniform(k[1], (in_channels, cmid), fan_in=in_channels),
        dw2=_conv_uniform(k[2], (9, cmid), fan_in=9),
        pw2=_conv_uniform(k[3], (cmid, out_channels), fan_in=cmid),
        rw=_conv_uniform(k[4], (in_channels, out_channels), fan_in=in_channels),  # residual 1x1
        s1d=s1d, b1d=b1d, s1p=s1p, b1p=b1p,
        s2d=s2d, b2d=b2d, s2p=s2p, b2p=b2p,
    )


# ---------------------------------------------------------------------------
# Pure-JAX reference (for numerical validation; uses the unfused BN form)
# ---------------------------------------------------------------------------

def _ref_sepconv(x, dw, sd, bd, pw, sp, bp):
    c = x.shape[-1]
    k = dw.reshape(3, 3, 1, c)
    y = jax.lax.conv_general_dilated(
        x, k, window_strides=(1, 1), padding=((1, 1), (1, 1)),
        dimension_numbers=("NHWC", "HWIO", "NHWC"), feature_group_count=c)
    y = jnp.maximum(y * sd + bd, 0.0)
    y = jnp.einsum("nhwc,co->nhwo", y, pw)
    return jnp.maximum(y * sp + bp, 0.0)


def down_reference(x_nhwc, p):
    xp = jax.lax.reduce_window(x_nhwc, -jnp.inf, jax.lax.max,
                               (1, 2, 2, 1), (1, 2, 2, 1), "VALID")
    h1 = _ref_sepconv(xp, p["dw1"], p["s1d"], p["b1d"], p["pw1"], p["s1p"], p["b1p"])
    h2 = _ref_sepconv(h1, p["dw2"], p["s2d"], p["b2d"], p["pw2"], p["s2p"], p["b2p"])
    return jnp.einsum("nhwc,co->nhwo", xp, p["rw"]) + h2


if __name__ == "__main__":
    key = jax.random.PRNGKey(0)
    k_x, k_p = jax.random.split(key)

    # Down(64, 128), e.g. UNet's down1, at a small 16x16 spatial size.
    N, CIN, H, W = 2, 64, 16, 16
    COUT = 128
    x = jax.random.normal(k_x, (N, CIN, H, W), dtype=jnp.float32)
    params = make_down_params(k_p, CIN, COUT)

    out = jax.block_until_ready(down_forward(x, params))
    assert out.shape == (N, COUT, H // 2, W // 2)
    assert bool(jnp.all(jnp.isfinite(out)))

    # Numerical check vs. a pure-JAX reference (bf16 MXU operands -> small tolerance).
    ref = jnp.transpose(down_reference(jnp.transpose(x, (0, 2, 3, 1)), params), (0, 3, 1, 2))
    max_err = float(jnp.max(jnp.abs(out - ref)))
    assert max_err < 5e-2, f"max abs err vs reference: {max_err}"

    print("KERNEL_OK")
</pallas_src>

<mosaic_0001>
module attributes {stable_mosaic.version = 11 : i64} {
  func.func @_down_kernel(%arg0: i32, %arg1: memref<2x16x8x128xf32, #tpu.memory_space<vmem>>, %arg2: memref<9x64xf32, #tpu.memory_space<vmem>>, %arg3: memref<1x64xf32, #tpu.memory_space<vmem>>, %arg4: memref<64x128xbf16, #tpu.memory_space<vmem>>, %arg5: memref<1x128xf32, #tpu.memory_space<vmem>>, %arg6: memref<9x128xf32, #tpu.memory_space<vmem>>, %arg7: memref<1x128xf32, #tpu.memory_space<vmem>>, %arg8: memref<128x128xbf16, #tpu.memory_space<vmem>>, %arg9: memref<1x128xf32, #tpu.memory_space<vmem>>, %arg10: memref<64x128xbf16, #tpu.memory_space<vmem>>, %arg11: memref<2x8x8x128xf32, #tpu.memory_space<vmem>>, %arg12: memref<2x10x10x64xf32, #tpu.memory_space<vmem>>, %arg13: memref<2x10x10x128xf32, #tpu.memory_space<vmem>>) attributes {dimension_semantics = [#tpu.dimension_semantics<parallel>], iteration_bounds = array<i64: 1>, scalar_prefetch = 0 : i64, scratch_operands = 2 : i64, tpu.core_type = #tpu.core_type<tc>, window_params = [{transform_indices = @transform_0, window_bounds = array<i64: 2, 16, 8, 128>}, {pipeline_mode = #tpu.pipeline_mode<synchronous>, transform_indices = @transform_1, window_bounds = array<i64: 9, 64>}, {pipeline_mode = #tpu.pipeline_mode<synchronous>, transform_indices = @transform_2, window_bounds = array<i64: 1, 64>}, {pipeline_mode = #tpu.pipeline_mode<synchronous>, transform_indices = @transform_3, window_bounds = array<i64: 64, 128>}, {pipeline_mode = #tpu.pipeline_mode<synchronous>, transform_indices = @transform_4, window_bounds = array<i64: 1, 128>}, {pipeline_mode = #tpu.pipeline_mode<synchronous>, transform_indices = @transform_5, window_bounds = array<i64: 9, 128>}, {pipeline_mode = #tpu.pipeline_mode<synchronous>, transform_indices = @transform_6, window_bounds = array<i64: 1, 128>}, {pipeline_mode = #tpu.pipeline_mode<synchronous>, transform_indices = @transform_7, window_bounds = array<i64: 128, 128>}, {pipeline_mode = #tpu.pipeline_mode<synchronous>, transform_indices = @transform_8, window_bounds = array<i64: 1, 128>}, {pipeline_mode = #tpu.pipeline_mode<synchronous>, transform_indices = @transform_9, window_bounds = array<i64: 64, 128>}, {transform_indices = @transform_10, window_bounds = array<i64: 2, 8, 8, 128>}]} {
    %c0 = arith.constant 0 : index
    %c0_0 = arith.constant 0 : index
    %c0_1 = arith.constant 0 : index
    %c0_2 = arith.constant 0 : index
    %0 = vector.load %arg1[%c0, %c0_0, %c0_1, %c0_2] : memref<2x16x8x128xf32, #tpu.memory_space<vmem>>, vector<2x16x8x128xf32>
    %1 = vector.shape_cast %0 : vector<2x16x8x128xf32> to vector<2x8x2x8x128xf32>
    %cst = arith.constant dense<0xFF800000> : vector<2x8x8x128xf32>
    %2 = vector.multi_reduction <maximumf>, %1, %cst [2] : vector<2x8x2x8x128xf32> to vector<2x8x8x128xf32>
    %3 = vector.extract_strided_slice %2 {offsets = [0, 0, 0, 0], sizes = [2, 8, 8, 64], strides = [1, 1, 1, 1]} : vector<2x8x8x128xf32> to vector<2x8x8x64xf32>
    %4 = vector.extract_strided_slice %2 {offsets = [0, 0, 0, 64], sizes = [2, 8, 8, 64], strides = [1, 1, 1, 1]} : vector<2x8x8x128xf32> to vector<2x8x8x64xf32>
    %5 = arith.maximumf %3, %4 : vector<2x8x8x64xf32>
    %cst_3 = arith.constant 0.000000e+00 : f32
    %6 = vector.broadcast %cst_3 : f32 to vector<2x1x10x64xf32>
    %c0_4 = arith.constant 0 : index
    %c0_5 = arith.constant 0 : index
    %c0_6 = arith.constant 0 : index
    %c0_7 = arith.constant 0 : index
    %7 = vector.load %arg12[%c0_4, %c0_5, %c0_6, %c0_7] : memref<2x10x10x64xf32, #tpu.memory_space<vmem>>, vector<2x1x10x64xf32>
    tpu.vector_store %arg12[%c0_4, %c0_5, %c0_6, %c0_7], %6 {strides = array<i32>} : memref<2x10x10x64xf32, #tpu.memory_space<vmem>>, vector<2x1x10x64xf32>,
    %c0_8 = arith.constant 0 : index
    %c9 = arith.constant 9 : index
    %c0_9 = arith.constant 0 : index
    %c0_10 = arith.constant 0 : index
    %8 = vector.load %arg12[%c0_8, %c9, %c0_9, %c0_10] : memref<2x10x10x64xf32, #tpu.memory_space<vmem>>, vector<2x1x10x64xf32>
    tpu.vector_store %arg12[%c0_8, %c9, %c0_9, %c0_10], %6 {strides = array<i32>} : memref<2x10x10x64xf32, #tpu.memory_space<vmem>>, vector<2x1x10x64xf32>,
    %cst_11 = arith.constant 0.000000e+00 : f32
    %9 = vector.broadcast %cst_11 : f32 to vector<2x8x1x64xf32>
    %c0_12 = arith.constant 0 : index
    %c1 = arith.constant 1 : index
    %c0_13 = arith.constant 0 : index
    %c0_14 = arith.constant 0 : index
    %10 = vector.load %arg12[%c0_12, %c1, %c0_13, %c0_14] : memref<2x10x10x64xf32, #tpu.memory_space<vmem>>, vector<2x8x1x64xf32>
    tpu.vector_store %arg12[%c0_12, %c1, %c0_13, %c0_14], %9 {strides = array<i32>} : memref<2x10x10x64xf32, #tpu.memory_space<vmem>>, vector<2x8x1x64xf32>,
    %c0_15 = arith.constant 0 : index
    %c1_16 = arith.constant 1 : index
    %c9_17 = arith.constant 9 : index
    %c0_18 = arith.constant 0 : index
    %11 = vector.load %arg12[%c0_15, %c1_16, %c9_17, %c0_18] : memref<2x10x10x64xf32, #tpu.memory_space<vmem>>, vector<2x8x1x64xf32>
    tpu.vector_store %arg12[%c0_15, %c1_16, %c9_17, %c0_18], %9 {strides = array<i32>} : memref<2x10x10x64xf32, #tpu.memory_space<vmem>>, vector<2x8x1x64xf32>,
    %c0_19 = arith.constant 0 : index
    %c1_20 = arith.constant 1 : index
    %c1_21 = arith.constant 1 : index
    %c0_22 = arith.constant 0 : index
    %12 = vector.load %arg12[%c0_19, %c1_20, %c1_21, %c0_22] : memref<2x10x10x64xf32, #tpu.memory_space<vmem>>, vector<2x8x8x64xf32>
    tpu.vector_store %arg12[%c0_19, %c1_20, %c1_21, %c0_22], %5 {strides = array<i32>} : memref<2x10x10x64xf32, #tpu.memory_space<vmem>>, vector<2x8x8x64xf32>,
    %c0_23 = arith.constant 0 : index
    %c0_24 = arith.constant 0 : index
    %13 = vector.load %arg2[%c0_23, %c0_24] : memref<9x64xf32, #tpu.memory_space<vmem>>, vector<9x64xf32>
    %c0_25 = arith.constant 0 : index
    %c0_26 = arith.constant 0 : index
    %c0_27 = arith.constant 0 : index
    %c0_28 = arith.constant 0 : index
    %14 = vector.load %arg12[%c0_25, %c0_26, %c0_27, %c0_28] : memref<2x10x10x64xf32, #tpu.memory_space<vmem>>, vector<2x10x8x64xf32>
    %c0_29 = arith.constant 0 : index
    %c0_30 = arith.constant 0 : index
    %c1_31 = arith.constant 1 : index
    %c0_32 = arith.constant 0 : index
    %15 = vector.load %arg12[%c0_29, %c0_30, %c1_31, %c0_32] : memref<2x10x10x64xf32, #tpu.memory_space<vmem>>, vector<2x10x8x64xf32>
    %c0_33 = arith.constant 0 : index
    %c0_34 = arith.constant 0 : index
    %c2 = arith.constant 2 : index
    %c0_35 = arith.constant 0 : index
    %16 = vector.load %arg12[%c0_33, %c0_34, %c2, %c0_35] : memref<2x10x10x64xf32, #tpu.memory_space<vmem>>, vector<2x10x8x64xf32>
    %17 = vector.extract_strided_slice %14 {offsets = [0, 0, 0, 0], sizes = [2, 8, 8, 64], strides = [1, 1, 1, 1]} : vector<2x10x8x64xf32> to vector<2x8x8x64xf32>
    %18 = vector.extract_strided_slice %13 {offsets = [0, 0], sizes = [1, 64], strides = [1, 1]} : vector<9x64xf32> to vector<1x64xf32>
    %19 = vector.shape_cast %18 : vector<1x64xf32> to vector<64xf32>
    %20 = vector.shape_cast %19 : vector<64xf32> to vector<1x1x1x64xf32>
    %21 = vector.broadcast %20 : vector<1x1x1x64xf32> to vector<2x8x8x64xf32>
    %22 = arith.mulf %17, %21 : vector<2x8x8x64xf32>
    %23 = vector.extract_strided_slice %14 {offsets = [0, 1, 0, 0], sizes = [2, 8, 8, 64], strides = [1, 1, 1, 1]} : vector<2x10x8x64xf32> to vector<2x8x8x64xf32>
    %24 = vector.extract_strided_slice %13 {offsets = [3, 0], sizes = [1, 64], strides = [1, 1]} : vector<9x64xf32> to vector<1x64xf32>
    %25 = vector.shape_cast %24 : vector<1x64xf32> to vector<64xf32>
    %26 = vector.shape_cast %25 : vector<64xf32> to vector<1x1x1x64xf32>
    %27 = vector.broadcast %26 : vector<1x1x1x64xf32> to vector<2x8x8x64xf32>
    %28 = arith.mulf %23, %27 : vector<2x8x8x64xf32>
    %29 = arith.addf %22, %28 : vector<2x8x8x64xf32>
    %30 = vector.extract_strided_slice %14 {offsets = [0, 2, 0, 0], sizes = [2, 8, 8, 64], strides = [1, 1, 1, 1]} : vector<2x10x8x64xf32> to vector<2x8x8x64xf32>
    %31 = vector.extract_strided_slice %13 {offsets = [6, 0], sizes = [1, 64], strides = [1, 1]} : vector<9x64xf32> to vector<1x64xf32>
    %32 = vector.shape_cast %31 : vector<1x64xf32> to vector<64xf32>
    %33 = vector.shape_cast %32 : vector<64xf32> to vector<1x1x1x64xf32>
    %34 = vector.broadcast %33 : vector<1x1x1x64xf32> to vector<2x8x8x64xf32>
    %35 = arith.mulf %30, %34 : vector<2x8x8x64xf32>
    %36 = arith.addf %29, %35 : vector<2x8x8x64xf32>
    %37 = vector.extract_strided_slice %15 {offsets = [0, 0, 0, 0], sizes = [2, 8, 8, 64], strides = [1, 1, 1, 1]} : vector<2x10x8x64xf32> to vector<2x8x8x64xf32>
    %38 = vector.extract_strided_slice %13 {offsets = [1, 0], sizes = [1, 64], strides = [1, 1]} : vector<9x64xf32> to vector<1x64xf32>
    %39 = vector.shape_cast %38 : vector<1x64xf32> to vector<64xf32>
    %40 = vector.shape_cast %39 : vector<64xf32> to vector<1x1x1x64xf32>
    %41 = vector.broadcast %40 : vector<1x1x1x64xf32> to vector<2x8x8x64xf32>
    %42 = arith.mulf %37, %41 : vector<2x8x8x64xf32>
    %43 = arith.addf %36, %42 : vector<2x8x8x64xf32>
    %44 = vector.extract_strided_slice %15 {offsets = [0, 1, 0, 0], sizes = [2, 8, 8, 64], strides = [1, 1, 1, 1]} : vector<2x10x8x64xf32> to vector<2x8x8x64xf32>
    %45 = vector.extract_strided_slice %13 {offsets = [4, 0], sizes = [1, 64], strides = [1, 1]} : vector<9x64xf32> to vector<1x64xf32>
    %46 = vector.shape_cast %45 : vector<1x64xf32> to vector<64xf32>
    %47 = vector.shape_cast %46 : vector<64xf32> to vector<1x1x1x64xf32>
    %48 = vector.broadcast %47 : vector<1x1x1x64xf32> to vector<2x8x8x64xf32>
    %49 = arith.mulf %44, %48 : vector<2x8x8x64xf32>
    %50 = arith.addf %43, %49 : vector<2x8x8x64xf32>
    %51 = vector.extract_strided_slice %15 {offsets = [0, 2, 0, 0], sizes = [2, 8, 8, 64], strides = [1, 1, 1, 1]} : vector<2x10x8x64xf32> to vector<2x8x8x64xf32>
    %52 = vector.extract_strided_slice %13 {offsets = [7, 0], sizes = [1, 64], strides = [1, 1]} : vector<9x64xf32> to vector<1x64xf32>
    %53 = vector.shape_cast %52 : vector<1x64xf32> to vector<64xf32>
    %54 = vector.shape_cast %53 : vector<64xf32> to vector<1x1x1x64xf32>
    %55 = vector.broadcast %54 : vector<1x1x1x64xf32> to vector<2x8x8x64xf32>
    %56 = arith.mulf %51, %55 : vector<2x8x8x64xf32>
    %57 = arith.addf %50, %56 : vector<2x8x8x64xf32>
    %58 = vector.extract_strided_slice %16 {offsets = [0, 0, 0, 0], sizes = [2, 8, 8, 64], strides = [1, 1, 1, 1]} : vector<2x10x8x64xf32> to vector<2x8x8x64xf32>
    %59 = vector.extract_strided_slice %13 {offsets = [2, 0], sizes = [1, 64], strides = [1, 1]} : vector<9x64xf32> to vector<1x64xf32>
    %60 = vector.shape_cast %59 : vector<1x64xf32> to vector<64xf32>
    %61 = vector.shape_cast %60 : vector<64xf32> to vector<1x1x1x64xf32>
    %62 = vector.broadcast %61 : vector<1x1x1x64xf32> to vector<2x8x8x64xf32>
    %63 = arith.mulf %58, %62 : vector<2x8x8x64xf32>
    %64 = arith.addf %57, %63 : vector<2x8x8x64xf32>
    %65 = vector.extract_strided_slice %16 {offsets = [0, 1, 0, 0], sizes = [2, 8, 8, 64], strides = [1, 1, 1, 1]} : vector<2x10x8x64xf32> to vector<2x8x8x64xf32>
    %66 = vector.extract_strided_slice %13 {offsets = [5, 0], sizes = [1, 64], strides = [1, 1]} : vector<9x64xf32> to vector<1x64xf32>
    %67 = vector.shape_cast %66 : vector<1x64xf32> to vector<64xf32>
    %68 = vector.shape_cast %67 : vector<64xf32> to vector<1x1x1x64xf32>
    %69 = vector.broadcast %68 : vector<1x1x1x64xf32> to vector<2x8x8x64xf32>
    %70 = arith.mulf %65, %69 : vector<2x8x8x64xf32>
    %71 = arith.addf %64, %70 : vector<2x8x8x64xf32>
    %72 = vector.extract_strided_slice %16 {offsets = [0, 2, 0, 0], sizes = [2, 8, 8, 64], strides = [1, 1, 1, 1]} : vector<2x10x8x64xf32> to vector<2x8x8x64xf32>
    %73 = vector.extract_strided_slice %13 {offsets = [8, 0], sizes = [1, 64], strides = [1, 1]} : vector<9x64xf32> to vector<1x64xf32>
    %74 = vector.shape_cast %73 : vector<1x64xf32> to vector<64xf32>
    %75 = vector.shape_cast %74 : vector<64xf32> to vector<1x1x1x64xf32>
    %76 = vector.broadcast %75 : vector<1x1x1x64xf32> to vector<2x8x8x64xf32>
    %77 = arith.mulf %72, %76 : vector<2x8x8x64xf32>
    %78 = arith.addf %71, %77 : vector<2x8x8x64xf32>
    %c0_36 = arith.constant 0 : index
    %c0_37 = arith.constant 0 : index
    %79 = vector.load %arg3[%c0_36, %c0_37] : memref<1x64xf32, #tpu.memory_space<vmem>>, vector<1x64xf32>
    %80 = vector.shape_cast %79 : vector<1x64xf32> to vector<1x1x1x64xf32>
    %81 = vector.broadcast %80 : vector<1x1x1x64xf32> to vector<2x8x8x64xf32>
    %82 = arith.addf %78, %81 : vector<2x8x8x64xf32>
    %cst_38 = arith.constant 0.000000e+00 : f32
    %83 = vector.broadcast %cst_38 : f32 to vector<2x8x8x64xf32>
    %84 = arith.maximumf %82, %83 : vector<2x8x8x64xf32>
    %85 = vector.shape_cast %84 : vector<2x8x8x64xf32> to vector<128x64xf32>
    %86 = arith.truncf %85 : vector<128x64xf32> to vector<128x64xbf16>
    %c0_39 = arith.constant 0 : index
    %c0_40 = arith.constant 0 : index
    %87 = vector.load %arg4[%c0_39, %c0_40] : memref<64x128xbf16, #tpu.memory_space<vmem>>, vector<64x128xbf16>
    %cst_41 = arith.constant dense<0.000000e+00> : vector<128x128xf32>
    %88 = tpu.matmul %86, %87, %cst_41 {dimension_numbers = #tpu.dot_dimension_numbers<[1], [0], [0], [1], [0, 0, 1, 1], [], []>} : vector<128x64xbf16>, vector<64x128xbf16>, vector<128x128xf32> -> vector<128x128xf32>
    %c0_42 = arith.constant 0 : index
    %c0_43 = arith.constant 0 : index
    %89 = vector.load %arg5[%c0_42, %c0_43] : memref<1x128xf32, #tpu.memory_space<vmem>>, vector<1x128xf32>
    %90 = vector.broadcast %89 : vector<1x128xf32> to vector<128x128xf32>
    %91 = arith.addf %88, %90 : vector<128x128xf32>
    %cst_44 = arith.constant 0.000000e+00 : f32
    %92 = vector.broadcast %cst_44 : f32 to vector<128x128xf32>
    %93 = arith.maximumf %91, %92 : vector<128x128xf32>
    %94 = vector.shape_cast %93 : vector<128x128xf32> to vector<2x8x8x128xf32>
    %cst_45 = arith.constant 0.000000e+00 : f32
    %95 = vector.broadcast %cst_45 : f32 to vector<2x1x10x128xf32>
    %c0_46 = arith.constant 0 : index
    %c0_47 = arith.constant 0 : index
    %c0_48 = arith.constant 0 : index
    %c0_49 = arith.constant 0 : index
    %96 = vector.load %arg13[%c0_46, %c0_47, %c0_48, %c0_49] : memref<2x10x10x128xf32, #tpu.memory_space<vmem>>, vector<2x1x10x128xf32>
    tpu.vector_store %arg13[%c0_46, %c0_47, %c0_48, %c0_49], %95 {strides = array<i32>} : memref<2x10x10x128xf32, #tpu.memory_space<vmem>>, vector<2x1x10x128xf32>,
    %c0_50 = arith.constant 0 : index
    %c9_51 = arith.constant 9 : index
    %c0_52 = arith.constant 0 : index
    %c0_53 = arith.constant 0 : index
    %97 = vector.load %arg13[%c0_50, %c9_51, %c0_52, %c0_53] : memref<2x10x10x128xf32, #tpu.memory_space<vmem>>, vector<2x1x10x128xf32>
    tpu.vector_store %arg13[%c0_50, %c9_51, %c0_52, %c0_53], %95 {strides = array<i32>} : memref<2x10x10x128xf32, #tpu.memory_space<vmem>>, vector<2x1x10x128xf32>,
    %cst_54 = arith.constant 0.000000e+00 : f32
    %98 = vector.broadcast %cst_54 : f32 to vector<2x8x1x128xf32>
    %c0_55 = arith.constant 0 : index
    %c1_56 = arith.constant 1 : index
    %c0_57 = arith.constant 0 : index
    %c0_58 = arith.constant 0 : index
    %99 = vector.load %arg13[%c0_55, %c1_56, %c0_57, %c0_58] : memref<2x10x10x128xf32, #tpu.memory_space<vmem>>, vector<2x8x1x128xf32>
    tpu.vector_store %arg13[%c0_55, %c1_56, %c0_57, %c0_58], %98 {strides = array<i32>} : memref<2x10x10x128xf32, #tpu.memory_space<vmem>>, vector<2x8x1x128xf32>,
    %c0_59 = arith.constant 0 : index
    %c1_60 = arith.constant 1 : index
    %c9_61 = arith.constant 9 : index
    %c0_62 = arith.constant 0 : index
    %100 = vector.load %arg13[%c0_59, %c1_60, %c9_61, %c0_62] : memref<2x10x10x128xf32, #tpu.memory_space<vmem>>, vector<2x8x1x128xf32>
    tpu.vector_store %arg13[%c0_59, %c1_60, %c9_61, %c0_62], %98 {strides = array<i32>} : memref<2x10x10x128xf32, #tpu.memory_space<vmem>>, vector<2x8x1x128xf32>,
    %c0_63 = arith.constant 0 : index
    %c1_64 = arith.constant 1 : index
    %c1_65 = arith.constant 1 : index
    %c0_66 = arith.constant 0 : index
    %101 = vector.load %arg13[%c0_63, %c1_64, %c1_65, %c0_66] : memref<2x10x10x128xf32, #tpu.memory_space<vmem>>, vector<2x8x8x128xf32>
    tpu.vector_store %arg13[%c0_63, %c1_64, %c1_65, %c0_66], %94 {strides = array<i32>} : memref<2x10x10x128xf32, #tpu.memory_space<vmem>>, vector<2x8x8x128xf32>,
    %c0_67 = arith.constant 0 : index
    %c0_68 = arith.constant 0 : index
    %102 = vector.load %arg6[%c0_67, %c0_68] : memref<9x128xf32, #tpu.memory_space<vmem>>, vector<9x128xf32>
    %c0_69 = arith.constant 0 : index
    %c0_70 = arith.constant 0 : index
    %c0_71 = arith.constant 0 : index
    %c0_72 = arith.constant 0 : index
    %103 = vector.load %arg13[%c0_69, %c0_70, %c0_71, %c0_72] : memref<2x10x10x128xf32, #tpu.memory_space<vmem>>, vector<2x10x8x128xf32>
    %c0_73 = arith.constant 0 : index
    %c0_74 = arith.constant 0 : index
    %c1_75 = arith.constant 1 : index
    %c0_76 = arith.constant 0 : index
    %104 = vector.load %arg13[%c0_73, %c0_74, %c1_75, %c0_76] : memref<2x10x10x128xf32, #tpu.memory_space<vmem>>, vector<2x10x8x128xf32>
    %c0_77 = arith.constant 0 : index
    %c0_78 = arith.constant 0 : index
    %c2_79 = arith.constant 2 : index
    %c0_80 = arith.constant 0 : index
    %105 = vector.load %arg13[%c0_77, %c0_78, %c2_79, %c0_80] : memref<2x10x10x128xf32, #tpu.memory_space<vmem>>, vector<2x10x8x128xf32>
    %106 = vector.extract_strided_slice %103 {offsets = [0, 0, 0, 0], sizes = [2, 8, 8, 128], strides = [1, 1, 1, 1]} : vector<2x10x8x128xf32> to vector<2x8x8x128xf32>
    %107 = vector.extract_strided_slice %102 {offsets = [0, 0], sizes = [1, 128], strides = [1, 1]} : vector<9x128xf32> to vector<1x128xf32>
    %108 = vector.shape_cast %107 : vector<1x128xf32> to vector<128xf32>
    %109 = vector.shape_cast %108 : vector<128xf32> to vector<1x1x1x128xf32>
    %110 = vector.broadcast %109 : vector<1x1x1x128xf32> to vector<2x8x8x128xf32>
    %111 = arith.mulf %106, %110 : vector<2x8x8x128xf32>
    %112 = vector.extract_strided_slice %103 {offsets = [0, 1, 0, 0], sizes = [2, 8, 8, 128], strides = [1, 1, 1, 1]} : vector<2x10x8x128xf32> to vector<2x8x8x128xf32>
    %113 = vector.extract_strided_slice %102 {offsets = [3, 0], sizes = [1, 128], strides = [1, 1]} : vector<9x128xf32> to vector<1x128xf32>
    %114 = vector.shape_cast %113 : vector<1x128xf32> to vector<128xf32>
    %115 = vector.shape_cast %114 : vector<128xf32> to vector<1x1x1x128xf32>
    %116 = vector.broadcast %115 : vector<1x1x1x128xf32> to vector<2x8x8x128xf32>
    %117 = arith.mulf %112, %116 : vector<2x8x8x128xf32>
    %118 = arith.addf %111, %117 : vector<2x8x8x128xf32>
    %119 = vector.extract_strided_slice %103 {offsets = [0, 2, 0, 0], sizes = [2, 8, 8, 128], strides = [1, 1, 1, 1]} : vector<2x10x8x128xf32> to vector<2x8x8x128xf32>
    %120 = vector.extract_strided_slice %102 {offsets = [6, 0], sizes = [1, 128], strides = [1, 1]} : vector<9x128xf32> to vector<1x128xf32>
    %121 = vector.shape_cast %120 : vector<1x128xf32> to vector<128xf32>
    %122 = vector.shape_cast %121 : vector<128xf32> to vector<1x1x1x128xf32>
    %123 = vector.broadcast %122 : vector<1x1x1x128xf32> to vector<2x8x8x128xf32>
    %124 = arith.mulf %119, %123 : vector<2x8x8x128xf32>
    %125 = arith.addf %118, %124 : vector<2x8x8x128xf32>
    %126 = vector.extract_strided_slice %104 {offsets = [0, 0, 0, 0], sizes = [2, 8, 8, 128], strides = [1, 1, 1, 1]} : vector<2x10x8x128xf32> to vector<2x8x8x128xf32>
    %127 = vector.extract_strided_slice %102 {offsets = [1, 0], sizes = [1, 128], strides = [1, 1]} : vector<9x128xf32> to vector<1x128xf32>
    %128 = vector.shape_cast %127 : vector<1x128xf32> to vector<128xf32>
    %129 = vector.shape_cast %128 : vector<128xf32> to vector<1x1x1x128xf32>
    %130 = vector.broadcast %129 : vector<1x1x1x128xf32> to vector<2x8x8x128xf32>
    %131 = arith.mulf %126, %130 : vector<2x8x8x128xf32>
    %132 = arith.addf %125, %131 : vector<2x8x8x128xf32>
    %133 = vector.extract_strided_slice %104 {offsets = [0, 1, 0, 0], sizes = [2, 8, 8, 128], strides = [1, 1, 1, 1]} : vector<2x10x8x128xf32> to vector<2x8x8x128xf32>
    %134 = vector.extract_strided_slice %102 {offsets = [4, 0], sizes = [1, 128], strides = [1, 1]} : vector<9x128xf32> to vector<1x128xf32>
    %135 = vector.shape_cast %134 : vector<1x128xf32> to vector<128xf32>
    %136 = vector.shape_cast %135 : vector<128xf32> to vector<1x1x1x128xf32>
    %137 = vector.broadcast %136 : vector<1x1x1x128xf32> to vector<2x8x8x128xf32>
    %138 = arith.mulf %133, %137 : vector<2x8x8x128xf32>
    %139 = arith.addf %132, %138 : vector<2x8x8x128xf32>
    %140 = vector.extract_strided_slice %104 {offsets = [0, 2, 0, 0], sizes = [2, 8, 8, 128], strides = [1, 1, 1, 1]} : vector<2x10x8x128xf32> to vector<2x8x8x128xf32>
    %141 = vector.extract_strided_slice %102 {offsets = [7, 0], sizes = [1, 128], strides = [1, 1]} : vector<9x128xf32> to vector<1x128xf32>
    %142 = vector.shape_cast %141 : vector<1x128xf32> to vector<128xf32>
    %143 = vector.shape_cast %142 : vector<128xf32> to vector<1x1x1x128xf32>
    %144 = vector.broadcast %143 : vector<1x1x1x128xf32> to vector<2x8x8x128xf32>
    %145 = arith.mulf %140, %144 : vector<2x8x8x128xf32>
    %146 = arith.addf %139, %145 : vector<2x8x8x128xf32>
    %147 = vector.extract_strided_slice %105 {offsets = [0, 0, 0, 0], sizes = [2, 8, 8, 128], strides = [1, 1, 1, 1]} : vector<2x10x8x128xf32> to vector<2x8x8x128xf32>
    %148 = vector.extract_strided_slice %102 {offsets = [2, 0], sizes = [1, 128], strides = [1, 1]} : vector<9x128xf32> to vector<1x128xf32>
    %149 = vector.shape_cast %148 : vector<1x128xf32> to vector<128xf32>
    %150 = vector.shape_cast %149 : vector<128xf32> to vector<1x1x1x128xf32>
    %151 = vector.broadcast %150 : vector<1x1x1x128xf32> to vector<2x8x8x128xf32>
    %152 = arith.mulf %147, %151 : vector<2x8x8x128xf32>
    %153 = arith.addf %146, %152 : vector<2x8x8x128xf32>
    %154 = vector.extract_strided_slice %105 {offsets = [0, 1, 0, 0], sizes = [2, 8, 8, 128], strides = [1, 1, 1, 1]} : vector<2x10x8x128xf32> to vector<2x8x8x128xf32>
    %155 = vector.extract_strided_slice %102 {offsets = [5, 0], sizes = [1, 128], strides = [1, 1]} : vector<9x128xf32> to vector<1x128xf32>
    %156 = vector.shape_cast %155 : vector<1x128xf32> to vector<128xf32>
    %157 = vector.shape_cast %156 : vector<128xf32> to vector<1x1x1x128xf32>
    %158 = vector.broadcast %157 : vector<1x1x1x128xf32> to vector<2x8x8x128xf32>
    %159 = arith.mulf %154, %158 : vector<2x8x8x128xf32>
    %160 = arith.addf %153, %159 : vector<2x8x8x128xf32>
    %161 = vector.extract_strided_slice %105 {offsets = [0, 2, 0, 0], sizes = [2, 8, 8, 128], strides = [1, 1, 1, 1]} : vector<2x10x8x128xf32> to vector<2x8x8x128xf32>
    %162 = vector.extract_strided_slice %102 {offsets = [8, 0], sizes = [1, 128], strides = [1, 1]} : vector<9x128xf32> to vector<1x128xf32>
    %163 = vector.shape_cast %162 : vector<1x128xf32> to vector<128xf32>
    %164 = vector.shape_cast %163 : vector<128xf32> to vector<1x1x1x128xf32>
    %165 = vector.broadcast %164 : vector<1x1x1x128xf32> to vector<2x8x8x128xf32>
    %166 = arith.mulf %161, %165 : vector<2x8x8x128xf32>
    %167 = arith.addf %160, %166 : vector<2x8x8x128xf32>
    %c0_81 = arith.constant 0 : index
    %c0_82 = arith.constant 0 : index
    %168 = vector.load %arg7[%c0_81, %c0_82] : memref<1x128xf32, #tpu.memory_space<vmem>>, vector<1x128xf32>
    %169 = vector.shape_cast %168 : vector<1x128xf32> to vector<1x1x1x128xf32>
    %170 = vector.broadcast %169 : vector<1x1x1x128xf32> to vector<2x8x8x128xf32>
    %171 = arith.addf %167, %170 : vector<2x8x8x128xf32>
    %cst_83 = arith.constant 0.000000e+00 : f32
    %172 = vector.broadcast %cst_83 : f32 to vector<2x8x8x128xf32>
    %173 = arith.maximumf %171, %172 : vector<2x8x8x128xf32>
    %174 = vector.shape_cast %173 : vector<2x8x8x128xf32> to vector<128x128xf32>
    %175 = arith.truncf %174 : vector<128x128xf32> to vector<128x128xbf16>
    %c0_84 = arith.constant 0 : index
    %c0_85 = arith.constant 0 : index
    %176 = vector.load %arg8[%c0_84, %c0_85] : memref<128x128xbf16, #tpu.memory_space<vmem>>, vector<128x128xbf16>
    %cst_86 = arith.constant dense<0.000000e+00> : vector<128x128xf32>
    %177 = tpu.matmul %175, %176, %cst_86 {dimension_numbers = #tpu.dot_dimension_numbers<[1], [0], [0], [1], [0, 0, 1, 1], [], []>} : vector<128x128xbf16>, vector<128x128xbf16>, vector<128x128xf32> -> vector<128x128xf32>
    %c0_87 = arith.constant 0 : index
    %c0_88 = arith.constant 0 : index
    %178 = vector.load %arg9[%c0_87, %c0_88] : memref<1x128xf32, #tpu.memory_space<vmem>>, vector<1x128xf32>
    %179 = vector.broadcast %178 : vector<1x128xf32> to vector<128x128xf32>
    %180 = arith.addf %177, %179 : vector<128x128xf32>
    %cst_89 = arith.constant 0.000000e+00 : f32
    %181 = vector.broadcast %cst_89 : f32 to vector<128x128xf32>
    %182 = arith.maximumf %180, %181 : vector<128x128xf32>
    %183 = vector.shape_cast %5 : vector<2x8x8x64xf32> to vector<128x64xf32>
    %184 = arith.truncf %183 : vector<128x64xf32> to vector<128x64xbf16>
    %c0_90 = arith.constant 0 : index
    %c0_91 = arith.constant 0 : index
    %185 = vector.load %arg10[%c0_90, %c0_91] : memref<64x128xbf16, #tpu.memory_space<vmem>>, vector<64x128xbf16>
    %cst_92 = arith.constant dense<0.000000e+00> : vector<128x128xf32>
    %186 = tpu.matmul %184, %185, %cst_92 {dimension_numbers = #tpu.dot_dimension_numbers<[1], [0], [0], [1], [0, 0, 1, 1], [], []>} : vector<128x64xbf16>, vector<64x128xbf16>, vector<128x128xf32> -> vector<128x128xf32>
    %187 = arith.addf %186, %182 : vector<128x128xf32>
    %188 = vector.shape_cast %187 : vector<128x128xf32> to vector<2x8x8x128xf32>
    %c0_93 = arith.constant 0 : index
    %c0_94 = arith.constant 0 : index
    %c0_95 = arith.constant 0 : index
    %c0_96 = arith.constant 0 : index
    %189 = vector.load %arg11[%c0_93, %c0_94, %c0_95, %c0_96] : memref<2x8x8x128xf32, #tpu.memory_space<vmem>>, vector<2x8x8x128xf32>
    tpu.vector_store %arg11[%c0_93, %c0_94, %c0_95, %c0_96], %188 {strides = array<i32>} : memref<2x8x8x128xf32, #tpu.memory_space<vmem>>, vector<2x8x8x128xf32>,
    return
  }
  func.func @transform_0(%arg0: i32) -> (i32, i32, i32, i32) {
    %c0_i32 = arith.constant 0 : i32
    %c0_i32_0 = arith.constant 0 : i32
    %c0_i32_1 = arith.constant 0 : i32
    %c0_i32_2 = arith.constant 0 : i32
    return %arg0, %c0_i32, %c0_i32_0, %c0_i32_1 : i32, i32, i32, i32
  }
  func.func @transform_1(%arg0: i32) -> (i32, i32) {
    %c0_i32 = arith.constant 0 : i32
    %c0_i32_0 = arith.constant 0 : i32
    %c0_i32_1 = arith.constant 0 : i32
    return %c0_i32, %c0_i32_0 : i32, i32
  }
  func.func @transform_2(%arg0: i32) -> (i32, i32) {
    %c0_i32 = arith.constant 0 : i32
    %c0_i32_0 = arith.constant 0 : i32
    %c0_i32_1 = arith.constant 0 : i32
    return %c0_i32, %c0_i32_0 : i32, i32
  }
  func.func @transform_3(%arg0: i32) -> (i32, i32) {
    %c0_i32 = arith.constant 0 : i32
    %c0_i32_0 = arith.constant 0 : i32
    %c0_i32_1 = arith.constant 0 : i32
    return %c0_i32, %c0_i32_0 : i32, i32
  }
  func.func @transform_4(%arg0: i32) -> (i32, i32) {
    %c0_i32 = arith.constant 0 : i32
    %c0_i32_0 = arith.constant 0 : i32
    %c0_i32_1 = arith.constant 0 : i32
    return %c0_i32, %c0_i32_0 : i32, i32
  }
  func.func @transform_5(%arg0: i32) -> (i32, i32) {
    %c0_i32 = arith.constant 0 : i32
    %c0_i32_0 = arith.constant 0 : i32
    %c0_i32_1 = arith.constant 0 : i32
    return %c0_i32, %c0_i32_0 : i32, i32
  }
  func.func @transform_6(%arg0: i32) -> (i32, i32) {
    %c0_i32 = arith.constant 0 : i32
    %c0_i32_0 = arith.constant 0 : i32
    %c0_i32_1 = arith.constant 0 : i32
    return %c0_i32, %c0_i32_0 : i32, i32
  }
  func.func @transform_7(%arg0: i32) -> (i32, i32) {
    %c0_i32 = arith.constant 0 : i32
    %c0_i32_0 = arith.constant 0 : i32
    %c0_i32_1 = arith.constant 0 : i32
    return %c0_i32, %c0_i32_0 : i32, i32
  }
  func.func @transform_8(%arg0: i32) -> (i32, i32) {
    %c0_i32 = arith.constant 0 : i32
    %c0_i32_0 = arith.constant 0 : i32
    %c0_i32_1 = arith.constant 0 : i32
    return %c0_i32, %c0_i32_0 : i32, i32
  }
  func.func @transform_9(%arg0: i32) -> (i32, i32) {
    %c0_i32 = arith.constant 0 : i32
    %c0_i32_0 = arith.constant 0 : i32
    %c0_i32_1 = arith.constant 0 : i32
    return %c0_i32, %c0_i32_0 : i32, i32
  }
  func.func @transform_10(%arg0: i32) -> (i32, i32, i32, i32) {
    %c0_i32 = arith.constant 0 : i32
    %c0_i32_0 = arith.constant 0 : i32
    %c0_i32_1 = arith.constant 0 : i32
    %c0_i32_2 = arith.constant 0 : i32
    return %arg0, %c0_i32, %c0_i32_0, %c0_i32_1 : i32, i32, i32, i32
  }
}

</mosaic_0001>

<llo_original>
// kernel: tpu_custom_call.1
$region0: #{tpu_custom_call.1}
  #allocation0 [shape = 'u32[]', space=smem, size = 0x4, offset = 0x4, fixed_abs, tag = 'smem constant byte address 0x4 - core index']
  #allocation1 [shape = 'u32[72,128]{1,0:T(1,128)}', space=vmem, size = 0x9000, scoped, tag = 'internal scratch']
  #allocation2 [shape = 'f32[2,10,10,64]{3,2,1,0:T(8,128)}', space=vmem, size = 0x28000, scoped, tag = 'scratch operand']
  #allocation3 [shape = 'f32[2,10,10,128]{3,2,1,0:T(8,128)}', space=vmem, size = 0x28000, scoped, tag = 'scratch operand']
  %s0 = inlined_call_operand.hbm [shape: f32[2,16,8,128], index: 0, kind: input, shape index: {}]
  %s1 = inlined_call_operand.hbm [shape: f32[9,64], index: 1, kind: input, shape index: {}]
  %s2 = inlined_call_operand.vmem [shape: f32[1,64], index: 2, kind: input, shape index: {}]
  %s3 = inlined_call_operand.hbm [shape: bf16[64,128], index: 3, kind: input, shape index: {}]
  %s4 = inlined_call_operand.vmem [shape: f32[1,128], index: 4, kind: input, shape index: {}]
  %s5 = inlined_call_operand.hbm [shape: f32[9,128], index: 5, kind: input, shape index: {}]
  %s6 = inlined_call_operand.vmem [shape: f32[1,128], index: 6, kind: input, shape index: {}]
  %s7 = inlined_call_operand.hbm [shape: bf16[128,128], index: 7, kind: input, shape index: {}]
  %s8 = inlined_call_operand.vmem [shape: f32[1,128], index: 8, kind: input, shape index: {}]
  %s9 = inlined_call_operand.hbm [shape: bf16[64,128], index: 9, kind: input, shape index: {}]
  %s10 = inlined_call_operand.hbm [shape: f32[2,8,8,128], index: 10, kind: output, shape index: {}]
  %s11 = sld [smem:[#allocation0]]
  $region74: #{tpu_custom_call.1} parent=0
    _
  %s13 = ssub.s32 1, %s11
  %s14 = scalar_select 0, %s13, %s11
  $region1: #{tpu_custom_call.1} parent=0
    #allocation4 [shape = 'u8[131072]{0}', space=vmem, size = 0x20000, scoped, tag = 'input window, operand 0, single buffered']
    #allocation5 [shape = 's32[1]{0}', space=sflag, size = 0x4, scoped, tag = 'scoped memory for tpu_custom_call.1']
    #allocation6 [shape = 's32[1]{0}', space=sflag, size = 0x4, scoped, tag = 'scoped memory for tpu_custom_call.1']
    #allocation7 [shape = 'u8[8192]{0}', space=vmem, size = 0x2000, scoped, tag = 'input window, operand 1, single buffered']
    #allocation8 [shape = 's32[1]{0}', space=sflag, size = 0x4, scoped, tag = 'scoped memory for tpu_custom_call.1']
    #allocation9 [shape = 'u8[16384]{0}', space=vmem, size = 0x4000, scoped, tag = 'input window, operand 3, single buffered']
    #allocation10 [shape = 'u8[8192]{0}', space=vmem, size = 0x2000, scoped, tag = 'input window, operand 5, single buffered']
    #allocation11 [shape = 's32[1]{0}', space=sflag, size = 0x4, scoped, tag = 'scoped memory for tpu_custom_call.1']
    #allocation12 [shape = 'u8[32768]{0}', space=vmem, size = 0x8000, scoped, tag = 'input window, operand 7, single buffered']
    #allocation13 [shape = 'u8[16384]{0}', space=vmem, size = 0x4000, scoped, tag = 'input window, operand 9, single buffered']
    #allocation14 [shape = 's32[1]{0}', space=sflag, size = 0x4, scoped, tag = 'scoped memory for tpu_custom_call.1']
    #allocation15 [shape = 'u8[65536]{0}', space=vmem, size = 0x10000, scoped, tag = 'output window, operand 0, single buffered']
    %15 = vsyncpa [#allocation5], 0
    %16 = vsyncpa [#allocation8], 0
    %17 = vsyncpa [#allocation11], 0
    %18 = vsyncpa [#allocation14], 0
    %19 = vsyncpa [#allocation6], 0
    // Predicated region
    $region2: #{tpu_custom_call.1} parent=1 // pred_check
      _
    $region3: #{tpu_custom_call.1} parent=1 // pred_check_branch
      %21 = sbr.rel (0) target = $region5
    $region4: #{tpu_custom_call.1} parent=1 // pred_region
      %23 = vsyncadd [#allocation5], 0
      %s24 = sshll.u32 %s0, 4
      %s25 = int_to_ptr.hbm [resolvable:$true] %s24
      %s26 = sshll.u32 [#allocation4], 4
      %s27 = int_to_ptr.vmem [resolvable:$true] %s26
      %32 = dma.hbm_to_vmem [thread:$0]  %s25, 4096, %s27, [#allocation5], 128, 128, 8
    $region5: #{tpu_custom_call.1} parent=1 // pred_fallthru
      _
    // Predicated region
    $region6: #{tpu_custom_call.1} parent=1 // pred_check
      _
    $region7: #{tpu_custom_call.1} parent=1 // pred_check_branch
      %34 = sbr.rel (0) target = $region9
    $region8: #{tpu_custom_call.1} parent=1 // pred_region
      %36 = vsyncadd [#allocation8], 0
      %s37 = sshll.u32 %s1, 4
      %s38 = int_to_ptr.hbm [resolvable:$true] %s37
      %s39 = sshll.u32 [#allocation7], 4
      %s40 = int_to_ptr.vmem [resolvable:$true] %s39
      %45 = dma.hbm_to_vmem [thread:$0]  %s38, 256, %s40, [#allocation8], 128, 128, 8
    $region9: #{tpu_custom_call.1} parent=1 // pred_fallthru
      _
    // Predicated region
    $region10: #{tpu_custom_call.1} parent=1 // pred_check
      _
    $region11: #{tpu_custom_call.1} parent=1 // pred_check_branch
      %47 = sbr.rel (0) target = $region13
    $region12: #{tpu_custom_call.1} parent=1 // pred_region
      _
    $region13: #{tpu_custom_call.1} parent=1 // pred_fallthru
      _
    // Predicated region
    $region14: #{tpu_custom_call.1} parent=1 // pred_check
      _
    $region15: #{tpu_custom_call.1} parent=1 // pred_check_branch
      %49 = sbr.rel (0) target = $region17
    $region16: #{tpu_custom_call.1} parent=1 // pred_region
      %51 = vsyncadd [#allocation8], 0
      %s52 = sshll.u32 %s3, 4
      %s53 = int_to_ptr.hbm [resolvable:$true] %s52
      %s54 = sshll.u32 [#allocation9], 4
      %s55 = int_to_ptr.vmem [resolvable:$true] %s54
      %60 = dma.hbm_to_vmem [thread:$0]  %s53, 512, %s55, [#allocation8], 64, 64, 4
    $region17: #{tpu_custom_call.1} parent=1 // pred_fallthru
      _
    // Predicated region
    $region18: #{tpu_custom_call.1} parent=1 // pred_check
      _
    $region19: #{tpu_custom_call.1} parent=1 // pred_check_branch
      %62 = sbr.rel (0) target = $region21
    $region20: #{tpu_custom_call.1} parent=1 // pred_region
      _
    $region21: #{tpu_custom_call.1} parent=1 // pred_fallthru
      _
    // Predicated region
    $region22: #{tpu_custom_call.1} parent=1 // pred_check
      _
    $region23: #{tpu_custom_call.1} parent=1 // pred_check_branch
      %64 = sbr.rel (0) target = $region25
    $region24: #{tpu_custom_call.1} parent=1 // pred_region
      %66 = vsyncadd [#allocation11], 0
      %s67 = sshll.u32 %s5, 4
      %s68 = int_to_ptr.hbm [resolvable:$true] %s67
      %s69 = sshll.u32 [#allocation10], 4
      %s70 = int_to_ptr.vmem [resolvable:$true] %s69
      %75 = dma.hbm_to_vmem [thread:$0]  %s68, 256, %s70, [#allocation11], 128, 128, 8
    $region25: #{tpu_custom_call.1} parent=1 // pred_fallthru
      _
    // Predicated region
    $region26: #{tpu_custom_call.1} parent=1 // pred_check
      _
    $region27: #{tpu_custom_call.1} parent=1 // pred_check_branch
      %77 = sbr.rel (0) target = $region29
    $region28: #{tpu_custom_call.1} parent=1 // pred_region
      _
    $region29: #{tpu_custom_call.1} parent=1 // pred_fallthru
      _
    // Predicated region
    $region30: #{tpu_custom_call.1} parent=1 // pred_check
      _
    $region31: #{tpu_custom_call.1} parent=1 // pred_check_branch
      %79 = sbr.rel (0) target = $region33
    $region32: #{tpu_custom_call.1} parent=1 // pred_region
      %81 = vsyncadd [#allocation11], 0
      %s82 = sshll.u32 %s7, 4
      %s83 = int_to_ptr.hbm [resolvable:$true] %s82
      %s84 = sshll.u32 [#allocation12], 4
      %s85 = int_to_ptr.vmem [resolvable:$true] %s84
      %90 = dma.hbm_to_vmem [thread:$0]  %s83, 1024, %s85, [#allocation11], 64, 64, 4
    $region33: #{tpu_custom_call.1} parent=1 // pred_fallthru
      _
    // Predicated region
    $region34: #{tpu_custom_call.1} parent=1 // pred_check
      _
    $region35: #{tpu_custom_call.1} parent=1 // pred_check_branch
      %92 = sbr.rel (0) target = $region37
    $region36: #{tpu_custom_call.1} parent=1 // pred_region
      _
    $region37: #{tpu_custom_call.1} parent=1 // pred_fallthru
      _
    // Predicated region
    $region38: #{tpu_custom_call.1} parent=1 // pred_check
      _
    $region39: #{tpu_custom_call.1} parent=1 // pred_check_branch
      %94 = sbr.rel (0) target = $region41
    $region40: #{tpu_custom_call.1} parent=1 // pred_region
      %96 = vsyncadd [#allocation14], 0
      %s97 = sshll.u32 %s9, 4
      %s98 = int_to_ptr.hbm [resolvable:$true] %s97
      %s99 = sshll.u32 [#allocation13], 4
      %s100 = int_to_ptr.vmem [resolvable:$true] %s99
      %105 = dma.hbm_to_vmem [thread:$0]  %s98, 512, %s100, [#allocation14], 64, 64, 4
    $region41: #{tpu_custom_call.1} parent=1 // pred_fallthru
      _
    // Predicated region
    $region42: #{tpu_custom_call.1} parent=1 // pred_check
      _
    $region43: #{tpu_custom_call.1} parent=1 // pred_check_branch
      %107 = sbr.rel (0) target = $region45
    $region44: #{tpu_custom_call.1} parent=1 // pred_region
      %109 = dma.done [#allocation5], 4096
    $region45: #{tpu_custom_call.1} parent=1 // pred_fallthru
      _
    // Predicated region
    $region46: #{tpu_custom_call.1} parent=1 // pred_check
      _
    $region47: #{tpu_custom_call.1} parent=1 // pred_check_branch
      %111 = sbr.rel (0) target = $region49
    $region48: #{tpu_custom_call.1} parent=1 // pred_region
      %113 = dma.done [#allocation8], 256
    $region49: #{tpu_custom_call.1} parent=1 // pred_fallthru
      _
    // Predicated region
    $region50: #{tpu_custom_call.1} parent=1 // pred_check
      _
    $region51: #{tpu_custom_call.1} parent=1 // pred_check_branch
      %115 = sbr.rel (0) target = $region53
    $region52: #{tpu_custom_call.1} parent=1 // pred_region
      %117 = dma.done [#allocation8], 512
    $region53: #{tpu_custom_call.1} parent=1 // pred_fallthru
      _
    // Predicated region
    $region54: #{tpu_custom_call.1} parent=1 // pred_check
      _
    $region55: #{tpu_custom_call.1} parent=1 // pred_check_branch
      %119 = sbr.rel (0) target = $region57
    $region56: #{tpu_custom_call.1} parent=1 // pred_region
      %121 = dma.done [#allocation11], 256
    $region57: #{tpu_custom_call.1} parent=1 // pred_fallthru
      _
    // Predicated region
    $region58: #{tpu_custom_call.1} parent=1 // pred_check
      _
    $region59: #{tpu_custom_call.1} parent=1 // pred_check_branch
      %123 = sbr.rel (0) target = $region61
    $region60: #{tpu_custom_call.1} parent=1 // pred_region
      %125 = dma.done [#allocation11], 1024
    $region61: #{tpu_custom_call.1} parent=1 // pred_fallthru
      _
    // Predicated region
    $region62: #{tpu_custom_call.1} parent=1 // pred_check
      _
    $region63: #{tpu_custom_call.1} parent=1 // pred_check_branch
      %127 = sbr.rel (0) target = $region65
    $region64: #{tpu_custom_call.1} parent=1 // pred_region
      %129 = dma.done [#allocation14], 512
    $region65: #{tpu_custom_call.1} parent=1 // pred_fallthru
      _
    %v131 = vld [vmem:[#allocation4] sm:$0xff]
    %v132 = vld [vmem:[#allocation4 + $0x8] sm:$0xff]
    %v133 = vld [vmem:[#allocation4 + $0x10] sm:$0xff]
    %v134 = vld [vmem:[#allocation4 + $0x18] sm:$0xff]
    %v135 = vld [vmem:[#allocation4 + $0x20] sm:$0xff]
    %v136 = vld [vmem:[#allocation4 + $0x28] sm:$0xff]
    %v137 = vld [vmem:[#allocation4 + $0x30] sm:$0xff]
    %v138 = vld [vmem:[#allocation4 + $0x38] sm:$0xff]
    %v139 = vld [vmem:[#allocation4 + $0x40] sm:$0xff]
    %v140 = vld [vmem:[#allocation4 + $0x48] sm:$0xff]
    %v141 = vld [vmem:[#allocation4 + $0x50] sm:$0xff]
    %v142 = vld [vmem:[#allocation4 + $0x58] sm:$0xff]
    %v143 = vld [vmem:[#allocation4 + $0x60] sm:$0xff]
    %v144 = vld [vmem:[#allocation4 + $0x68] sm:$0xff]
    %v145 = vld [vmem:[#allocation4 + $0x70] sm:$0xff]
    %v146 = vld [vmem:[#allocation4 + $0x78] sm:$0xff]
    %v147 = vld [vmem:[#allocation4 + $0x80] sm:$0xff]
    %v148 = vld [vmem:[#allocation4 + $0x88] sm:$0xff]
    %v149 = vld [vmem:[#allocation4 + $0x90] sm:$0xff]
    %v150 = vld [vmem:[#allocation4 + $0x98] sm:$0xff]
    %v151 = vld [vmem:[#allocation4 + $0xa0] sm:$0xff]
    %v152 = vld [vmem:[#allocation4 + $0xa8] sm:$0xff]
    %v153 = vld [vmem:[#allocation4 + $0xb0] sm:$0xff]
    %v154 = vld [vmem:[#allocation4 + $0xb8] sm:$0xff]
    %v155 = vld [vmem:[#allocation4 + $0xc0] sm:$0xff]
    %v156 = vld [vmem:[#allocation4 + $0xc8] sm:$0xff]
    %v157 = vld [vmem:[#allocation4 + $0xd0] sm:$0xff]
    %v158 = vld [vmem:[#allocation4 + $0xd8] sm:$0xff]
    %v159 = vld [vmem:[#allocation4 + $0xe0] sm:$0xff]
    %v160 = vld [vmem:[#allocation4 + $0xe8] sm:$0xff]
    %v161 = vld [vmem:[#allocation4 + $0xf0] sm:$0xff]
    %v162 = vld [vmem:[#allocation4 + $0xf8] sm:$0xff]
    %v163 = vmax.f32 %v131, %v132
    %v164 = vmax.f32 %v133, %v134
    %v165 = vmax.f32 %v135, %v136
    %v166 = vmax.f32 %v137, %v138
    %v167 = vmax.f32 %v139, %v140
    %v168 = vmax.f32 %v141, %v142
    %v169 = vmax.f32 %v143, %v144
    %v170 = vmax.f32 %v145, %v146
    %v171 = vmax.f32 %v147, %v148
    %v172 = vmax.f32 %v149, %v150
    %v173 = vmax.f32 %v151, %v152
    %v174 = vmax.f32 %v153, %v154
    %v175 = vmax.f32 %v155, %v156
    %v176 = vmax.f32 %v157, %v158
    %v177 = vmax.f32 %v159, %v160
    %v178 = vmax.f32 %v161, %v162
    %195 = vrot.lane.b32.xlu0 %v163, 64
    %v196 = vpop.permute.xlu0 %195
    %197 = vrot.lane.b32.xlu0 %v164, 64
    %v198 = vpop.permute.xlu0 %197
    %199 = vrot.lane.b32.xlu0 %v165, 64
    %v200 = vpop.permute.xlu0 %199
    %201 = vrot.lane.b32.xlu0 %v166, 64
    %v202 = vpop.permute.xlu0 %201
    %203 = vrot.lane.b32.xlu0 %v167, 64
    %v204 = vpop.permute.xlu0 %203
    %205 = vrot.lane.b32.xlu0 %v168, 64
    %v206 = vpop.permute.xlu0 %205
    %207 = vrot.lane.b32.xlu0 %v169, 64
    %v208 = vpop.permute.xlu0 %207
    %209 = vrot.lane.b32.xlu0 %v170, 64
    %v210 = vpop.permute.xlu0 %209
    %211 = vrot.lane.b32.xlu0 %v171, 64
    %v212 = vpop.permute.xlu0 %211
    %213 = vrot.lane.b32.xlu0 %v172, 64
    %v214 = vpop.permute.xlu0 %213
    %215 = vrot.lane.b32.xlu0 %v173, 64
    %v216 = vpop.permute.xlu0 %215
    %217 = vrot.lane.b32.xlu0 %v174, 64
    %v218 = vpop.permute.xlu0 %217
    %219 = vrot.lane.b32.xlu0 %v175, 64
    %v220 = vpop.permute.xlu0 %219
    %221 = vrot.lane.b32.xlu0 %v176, 64
    %v222 = vpop.permute.xlu0 %221
    %223 = vrot.lane.b32.xlu0 %v177, 64
    %v224 = vpop.permute.xlu0 %223
    %225 = vrot.lane.b32.xlu0 %v178, 64
    %v226 = vpop.permute.xlu0 %225
    %v243 = vmax.f32 %v163, %v196
    %v244 = vmax.f32 %v164, %v198
    %v245 = vmax.f32 %v165, %v200
    %v246 = vmax.f32 %v166, %v202
    %v247 = vmax.f32 %v167, %v204
    %v248 = vmax.f32 %v168, %v206
    %v249 = vmax.f32 %v169, %v208
    %v250 = vmax.f32 %v170, %v210
    %v251 = vmax.f32 %v171, %v212
    %v252 = vmax.f32 %v172, %v214
    %v253 = vmax.f32 %v173, %v216
    %v254 = vmax.f32 %v174, %v218
    %v255 = vmax.f32 %v175, %v220
    %v256 = vmax.f32 %v176, %v222
    %v257 = vmax.f32 %v177, %v224
    %v258 = vmax.f32 %v178, %v226
    %vm259 = vcmask 523264
    %260 = vst.msk [vmem:[#allocation2] sm:$0xff] %vm259, 0.0
    %vm261 = vcmask 517120
    %262 = vst.msk [vmem:[#allocation2 + $0x8] sm:$0x3] %vm261, 0.0
    %263 = vst.msk [vmem:[#allocation2 + $0xa0] sm:$0xff] %vm259, 0.0
    %264 = vst.msk [vmem:[#allocation2 + $0xa8] sm:$0x3] %vm261, 0.0
    %s265 = scalar_lea.vmem [#allocation2], 144
    %266 = vst.msk [vmem:[%s265] sm:$0xff] %vm259, 0.0
    %267 = vst.msk [vmem:[%s265 + $0x8] sm:$0x3] %vm261, 0.0
    %268 = vst.msk [vmem:[%s265 + $0xa0] sm:$0xff] %vm259, 0.0
    %269 = vst.msk [vmem:[%s265 + $0xa8] sm:$0x3] %vm261, 0.0
    %s270 = scalar_lea.vmem [#allocation2], 16
    %vm271 = vcmask 516096
    %272 = vst.msk [vmem:[%s270] sm:$0x1] %vm271, 0.0
    %273 = vst.msk [vmem:[%s270 + $0x10] sm:$0x1] %vm271, 0.0
    %274 = vst.msk [vmem:[%s270 + $0x20] sm:$0x1] %vm271, 0.0
    %275 = vst.msk [vmem:[%s270 + $0x30] sm:$0x1] %vm271, 0.0
    %276 = vst.msk [vmem:[%s270 + $0x40] sm:$0x1] %vm271, 0.0
    %277 = vst.msk [vmem:[%s270 + $0x50] sm:$0x1] %vm271, 0.0
    %278 = vst.msk [vmem:[%s270 + $0x60] sm:$0x1] %vm271, 0.0
    %279 = vst.msk [vmem:[%s270 + $0x70] sm:$0x1] %vm271, 0.0
    %280 = vst.msk [vmem:[%s270 + $0xa0] sm:$0x1] %vm271, 0.0
    %281 = vst.msk [vmem:[%s270 + $0xb0] sm:$0x1] %vm271, 0.0
    %282 = vst.msk [vmem:[%s270 + $0xc0] sm:$0x1] %vm271, 0.0
    %283 = vst.msk [vmem:[%s270 + $0xd0] sm:$0x1] %vm271, 0.0
    %284 = vst.msk [vmem:[%s270 + $0xe0] sm:$0x1] %vm271, 0.0
    %285 = vst.msk [vmem:[%s270 + $0xf0] sm:$0x1] %vm271, 0.0
    %286 = vst.msk [vmem:[%s270 + $0x100] sm:$0x1] %vm271, 0.0
    %287 = vst.msk [vmem:[%s270 + $0x110] sm:$0x1] %vm271, 0.0
    %288 = vst.msk [vmem:[%s270 + $0x9] sm:$0x1] %vm271, 0.0
    %289 = vst.msk [vmem:[%s270 + $0x19] sm:$0x1] %vm271, 0.0
    %290 = vst.msk [vmem:[%s270 + $0x29] sm:$0x1] %vm271, 0.0
    %291 = vst.msk [vmem:[%s270 + $0x39] sm:$0x1] %vm271, 0.0
    %292 = vst.msk [vmem:[%s270 + $0x49] sm:$0x1] %vm271, 0.0
    %293 = vst.msk [vmem:[%s270 + $0x59] sm:$0x1] %vm271, 0.0
    %294 = vst.msk [vmem:[%s270 + $0x69] sm:$0x1] %vm271, 0.0
    %295 = vst.msk [vmem:[%s270 + $0x79] sm:$0x1] %vm271, 0.0
    %296 = vst.msk [vmem:[%s270 + $0xa9] sm:$0x1] %vm271, 0.0
    %297 = vst.msk [vmem:[%s270 + $0xb9] sm:$0x1] %vm271, 0.0
    %298 = vst.msk [vmem:[%s270 + $0xc9] sm:$0x1] %vm271, 0.0
    %299 = vst.msk [vmem:[%s270 + $0xd9] sm:$0x1] %vm271, 0.0
    %300 = vst.msk [vmem:[%s270 + $0xe9] sm:$0x1] %vm271, 0.0
    %301 = vst.msk [vmem:[%s270 + $0xf9] sm:$0x1] %vm271, 0.0
    %302 = vst.msk [vmem:[%s270 + $0x109] sm:$0x1] %vm271, 0.0
    %303 = vst.msk [vmem:[%s270 + $0x119] sm:$0x1] %vm271, 0.0
    %304 = vst.msk [vmem:[%s270 + $0x1] sm:$0xff] %vm259, %v243
    %305 = vst.msk [vmem:[%s270 + $0x11] sm:$0xff] %vm259, %v244
    %306 = vst.msk [vmem:[%s270 + $0x21] sm:$0xff] %vm259, %v245
    %307 = vst.msk [vmem:[%s270 + $0x31] sm:$0xff] %vm259, %v246
    %308 = vst.msk [vmem:[%s270 + $0x41] sm:$0xff] %vm259, %v247
    %309 = vst.msk [vmem:[%s270 + $0x51] sm:$0xff] %vm259, %v248
    %310 = vst.msk [vmem:[%s270 + $0x61] sm:$0xff] %vm259, %v249
    %311 = vst.msk [vmem:[%s270 + $0x71] sm:$0xff] %vm259, %v250
    %312 = vst.msk [vmem:[%s270 + $0xa1] sm:$0xff] %vm259, %v251
    %313 = vst.msk [vmem:[%s270 + $0xb1] sm:$0xff] %vm259, %v252
    %314 = vst.msk [vmem:[%s270 + $0xc1] sm:$0xff] %vm259, %v253
    %315 = vst.msk [vmem:[%s270 + $0xd1] sm:$0xff] %vm259, %v254
    %316 = vst.msk [vmem:[%s270 + $0xe1] sm:$0xff] %vm259, %v255
    %317 = vst.msk [vmem:[%s270 + $0xf1] sm:$0xff] %vm259, %v256
    %318 = vst.msk [vmem:[%s270 + $0x101] sm:$0xff] %vm259, %v257
    %319 = vst.msk [vmem:[%s270 + $0x111] sm:$0xff] %vm259, %v258
    %v320 = vld [vmem:[#allocation7] sm:$0xff]
    %v321 = vld [vmem:[#allocation7 + $0x8] sm:$0x1]
    %v322 = vld [vmem:[#allocation2] sm:$0xff]
    %v323 = vld [vmem:[#allocation2 + $0x10] sm:$0xff]
    %v324 = vld [vmem:[#allocation2 + $0x20] sm:$0xff]
    %v325 = vld [vmem:[#allocation2 + $0x30] sm:$0xff]
    %v326 = vld [vmem:[#allocation2 + $0x40] sm:$0xff]
    %v327 = vld [vmem:[#allocation2 + $0x50] sm:$0xff]
    %v328 = vld [vmem:[#allocation2 + $0x60] sm:$0xff]
    %v329 = vld [vmem:[#allocation2 + $0x70] sm:$0xff]
    %v330 = vld [vmem:[#allocation2 + $0x80] sm:$0xff]
    %v331 = vld [vmem:[#allocation2 + $0x90] sm:$0xff]
    %v332 = vld [vmem:[#allocation2 + $0xa0] sm:$0xff]
    %v333 = vld [vmem:[#allocation2 + $0xb0] sm:$0xff]
    %v334 = vld [vmem:[#allocation2 + $0xc0] sm:$0xff]
    %v335 = vld [vmem:[#allocation2 + $0xd0] sm:$0xff]
    %v336 = vld [vmem:[#allocation2 + $0xe0] sm:$0xff]
    %v337 = vld [vmem:[#allocation2 + $0xf0] sm:$0xff]
    %v338 = vld [vmem:[#allocation2 + $0x100] sm:$0xff]
    %v339 = vld [vmem:[#allocation2 + $0x110] sm:$0xff]
    %v340 = vld [vmem:[#allocation2 + $0x120] sm:$0xff]
    %v341 = vld [vmem:[#allocation2 + $0x130] sm:$0xff]
    %v342 = vld [vmem:[#allocation2 + $0x1] sm:$0xff]
    %v343 = vld [vmem:[#allocation2 + $0x11] sm:$0xff]
    %v344 = vld [vmem:[#allocation2 + $0x21] sm:$0xff]
    %v345 = vld [vmem:[#allocation2 + $0x31] sm:$0xff]
    %v346 = vld [vmem:[#allocation2 + $0x41] sm:$0xff]
    %v347 = vld [vmem:[#allocation2 + $0x51] sm:$0xff]
    %v348 = vld [vmem:[#allocation2 + $0x61] sm:$0xff]
    %v349 = vld [vmem:[#allocation2 + $0x71] sm:$0xff]
    %v350 = vld [vmem:[#allocation2 + $0x81] sm:$0xff]
    %v351 = vld [vmem:[#allocation2 + $0x91] sm:$0xff]
    %v352 = vld [vmem:[#allocation2 + $0xa1] sm:$0xff]
    %v353 = vld [vmem:[#allocation2 + $0xb1] sm:$0xff]
    %v354 = vld [vmem:[#allocation2 + $0xc1] sm:$0xff]
    %v355 = vld [vmem:[#allocation2 + $0xd1] sm:$0xff]
    %v356 = vld [vmem:[#allocation2 + $0xe1] sm:$0xff]
    %v357 = vld [vmem:[#allocation2 + $0xf1] sm:$0xff]
    %v358 = vld [vmem:[#allocation2 + $0x101] sm:$0xff]
    %v359 = vld [vmem:[#allocation2 + $0x111] sm:$0xff]
    %v360 = vld [vmem:[#allocation2 + $0x121] sm:$0xff]
    %v361 = vld [vmem:[#allocation2 + $0x131] sm:$0xff]
    %v362 = vld [vmem:[#allocation2 + $0x2] sm:$0xff]
    %v363 = vld [vmem:[#allocation2 + $0x12] sm:$0xff]
    %v364 = vld [vmem:[#allocation2 + $0x22] sm:$0xff]
    %v365 = vld [vmem:[#allocation2 + $0x32] sm:$0xff]
    %v366 = vld [vmem:[#allocation2 + $0x42] sm:$0xff]
    %v367 = vld [vmem:[#allocation2 + $0x52] sm:$0xff]
    %v368 = vld [vmem:[#allocation2 + $0x62] sm:$0xff]
    %v369 = vld [vmem:[#allocation2 + $0x72] sm:$0xff]
    %v370 = vld [vmem:[#allocation2 + $0x82] sm:$0xff]
    %v371 = vld [vmem:[#allocation2 + $0x92] sm:$0xff]
    %v372 = vld [vmem:[#allocation2 + $0xa2] sm:$0xff]
    %v373 = vld [vmem:[#allocation2 + $0xb2] sm:$0xff]
    %v374 = vld [vmem:[#allocation2 + $0xc2] sm:$0xff]
    %v375 = vld [vmem:[#allocation2 + $0xd2] sm:$0xff]
    %v376 = vld [vmem:[#allocation2 + $0xe2] sm:$0xff]
    %v377 = vld [vmem:[#allocation2 + $0xf2] sm:$0xff]
    %v378 = vld [vmem:[#allocation2 + $0x102] sm:$0xff]
    %v379 = vld [vmem:[#allocation2 + $0x112] sm:$0xff]
    %v380 = vld [vmem:[#allocation2 + $0x122] sm:$0xff]
    %v381 = vld [vmem:[#allocation2 + $0x132] sm:$0xff]
    %v382 = vperm.slane %v320, 0
    %v383 = vmul.f32 %v322, %v382
    %v384 = vmul.f32 %v323, %v382
    %v385 = vmul.f32 %v324, %v382
    %v386 = vmul.f32 %v325, %v382
    %v387 = vmul.f32 %v326, %v382
    %v388 = vmul.f32 %v327, %v382
    %v389 = vmul.f32 %v328, %v382
    %v390 = vmul.f32 %v329, %v382
    %v391 = vmul.f32 %v332, %v382
    %v392 = vmul.f32 %v333, %v382
    %v393 = vmul.f32 %v334, %v382
    %v394 = vmul.f32 %v335, %v382
    %v395 = vmul.f32 %v336, %v382
    %v396 = vmul.f32 %v337, %v382
    %v397 = vmul.f32 %v338, %v382
    %v398 = vmul.f32 %v339, %v382
    %v399 = vperm.slane %v320, 3
    %v400 = vmul.f32 %v323, %v399
    %v401 = vmul.f32 %v324, %v399
    %v402 = vmul.f32 %v325, %v399
    %v403 = vmul.f32 %v326, %v399
    %v404 = vmul.f32 %v327, %v399
    %v405 = vmul.f32 %v328, %v399
    %v406 = vmul.f32 %v329, %v399
    %v407 = vmul.f32 %v330, %v399
    %v408 = vmul.f32 %v333, %v399
    %v409 = vmul.f32 %v334, %v399
    %v410 = vmul.f32 %v335, %v399
    %v411 = vmul.f32 %v336, %v399
    %v412 = vmul.f32 %v337, %v399
    %v413 = vmul.f32 %v338, %v399
    %v414 = vmul.f32 %v339, %v399
    %v415 = vmul.f32 %v340, %v399
    %v416 = vadd.f32 %v383, %v400
    %v417 = vadd.f32 %v384, %v401
    %v418 = vadd.f32 %v385, %v402
    %v419 = vadd.f32 %v386, %v403
    %v420 = vadd.f32 %v387, %v404
    %v421 = vadd.f32 %v388, %v405
    %v422 = vadd.f32 %v389, %v406
    %v423 = vadd.f32 %v390, %v407
    %v424 = vadd.f32 %v391, %v408
    %v425 = vadd.f32 %v392, %v409
    %v426 = vadd.f32 %v393, %v410
    %v427 = vadd.f32 %v394, %v411
    %v428 = vadd.f32 %v395, %v412
    %v429 = vadd.f32 %v396, %v413
    %v430 = vadd.f32 %v397, %v414
    %v431 = vadd.f32 %v398, %v415
    %v432 = vperm.slane %v320, 6
    %v433 = vmul.f32 %v324, %v432
    %v434 = vmul.f32 %v325, %v432
    %v435 = vmul.f32 %v326, %v432
    %v436 = vmul.f32 %v327, %v432
    %v437 = vmul.f32 %v328, %v432
    %v438 = vmul.f32 %v329, %v432
    %v439 = vmul.f32 %v330, %v432
    %v440 = vmul.f32 %v331, %v432
    %v441 = vmul.f32 %v334, %v432
    %v442 = vmul.f32 %v335, %v432
    %v443 = vmul.f32 %v336, %v432
    %v444 = vmul.f32 %v337, %v432
    %v445 = vmul.f32 %v338, %v432
    %v446 = vmul.f32 %v339, %v432
    %v447 = vmul.f32 %v340, %v432
    %v448 = vmul.f32 %v341, %v432
    %v449 = vadd.f32 %v416, %v433
    %v450 = vadd.f32 %v417, %v434
    %v451 = vadd.f32 %v418, %v435
    %v452 = vadd.f32 %v419, %v436
    %v453 = vadd.f32 %v420, %v437
    %v454 = vadd.f32 %v421, %v438
    %v455 = vadd.f32 %v422, %v439
    %v456 = vadd.f32 %v423, %v440
    %v457 = vadd.f32 %v424, %v441
    %v458 = vadd.f32 %v425, %v442
    %v459 = vadd.f32 %v426, %v443
    %v460 = vadd.f32 %v427, %v444
    %v461 = vadd.f32 %v428, %v445
    %v462 = vadd.f32 %v429, %v446
    %v463 = vadd.f32 %v430, %v447
    %v464 = vadd.f32 %v431, %v448
    %v465 = vperm.slane %v320, 1
    %v466 = vmul.f32 %v342, %v465
    %v467 = vmul.f32 %v343, %v465
    %v468 = vmul.f32 %v344, %v465
    %v469 = vmul.f32 %v345, %v465
    %v470 = vmul.f32 %v346, %v465
    %v471 = vmul.f32 %v347, %v465
    %v472 = vmul.f32 %v348, %v465
    %v473 = vmul.f32 %v349, %v465
    %v474 = vmul.f32 %v352, %v465
    %v475 = vmul.f32 %v353, %v465
    %v476 = vmul.f32 %v354, %v465
    %v477 = vmul.f32 %v355, %v465
    %v478 = vmul.f32 %v356, %v465
    %v479 = vmul.f32 %v357, %v465
    %v480 = vmul.f32 %v358, %v465
    %v481 = vmul.f32 %v359, %v465
    %v482 = vadd.f32 %v449, %v466
    %v483 = vadd.f32 %v450, %v467
    %v484 = vadd.f32 %v451, %v468
    %v485 = vadd.f32 %v452, %v469
    %v486 = vadd.f32 %v453, %v470
    %v487 = vadd.f32 %v454, %v471
    %v488 = vadd.f32 %v455, %v472
    %v489 = vadd.f32 %v456, %v473
    %v490 = vadd.f32 %v457, %v474
    %v491 = vadd.f32 %v458, %v475
    %v492 = vadd.f32 %v459, %v476
    %v493 = vadd.f32 %v460, %v477
    %v494 = vadd.f32 %v461, %v478
    %v495 = vadd.f32 %v462, %v479
    %v496 = vadd.f32 %v463, %v480
    %v497 = vadd.f32 %v464, %v481
    %v498 = vperm.slane %v320, 4
    %v499 = vmul.f32 %v343, %v498
    %v500 = vmul.f32 %v344, %v498
    %v501 = vmul.f32 %v345, %v498
    %v502 = vmul.f32 %v346, %v498
    %v503 = vmul.f32 %v347, %v498
    %v504 = vmul.f32 %v348, %v498
    %v505 = vmul.f32 %v349, %v498
    %v506 = vmul.f32 %v350, %v498
    %v507 = vmul.f32 %v353, %v498
    %v508 = vmul.f32 %v354, %v498
    %v509 = vmul.f32 %v355, %v498
    %v510 = vmul.f32 %v356, %v498
    %v511 = vmul.f32 %v357, %v498
    %v512 = vmul.f32 %v358, %v498
    %v513 = vmul.f32 %v359, %v498
    %v514 = vmul.f32 %v360, %v498
    %v515 = vadd.f32 %v482, %v499
    %v516 = vadd.f32 %v483, %v500
    %v517 = vadd.f32 %v484, %v501
    %v518 = vadd.f32 %v485, %v502
    %v519 = vadd.f32 %v486, %v503
    %v520 = vadd.f32 %v487, %v504
    %v521 = vadd.f32 %v488, %v505
    %v522 = vadd.f32 %v489, %v506
    %v523 = vadd.f32 %v490, %v507
    %v524 = vadd.f32 %v491, %v508
    %v525 = vadd.f32 %v492, %v509
    %v526 = vadd.f32 %v493, %v510
    %v527 = vadd.f32 %v494, %v511
    %v528 = vadd.f32 %v495, %v512
    %v529 = vadd.f32 %v496, %v513
    %v530 = vadd.f32 %v497, %v514
    %v531 = vperm.slane %v320, 7
    %v532 = vmul.f32 %v344, %v531
    %v533 = vmul.f32 %v345, %v531
    %v534 = vmul.f32 %v346, %v531
    %v535 = vmul.f32 %v347, %v531
    %v536 = vmul.f32 %v348, %v531
    %v537 = vmul.f32 %v349, %v531
    %v538 = vmul.f32 %v350, %v531
    %v539 = vmul.f32 %v351, %v531
    %v540 = vmul.f32 %v354, %v531
    %v541 = vmul.f32 %v355, %v531
    %v542 = vmul.f32 %v356, %v531
    %v543 = vmul.f32 %v357, %v531
    %v544 = vmul.f32 %v358, %v531
    %v545 = vmul.f32 %v359, %v531
    %v546 = vmul.f32 %v360, %v531
    %v547 = vmul.f32 %v361, %v531
    %v548 = vadd.f32 %v515, %v532
    %v549 = vadd.f32 %v516, %v533
    %v550 = vadd.f32 %v517, %v534
    %v551 = vadd.f32 %v518, %v535
    %v552 = vadd.f32 %v519, %v536
    %v553 = vadd.f32 %v520, %v537
    %v554 = vadd.f32 %v521, %v538
    %v555 = vadd.f32 %v522, %v539
    %v556 = vadd.f32 %v523, %v540
    %v557 = vadd.f32 %v524, %v541
    %v558 = vadd.f32 %v525, %v542
    %v559 = vadd.f32 %v526, %v543
    %v560 = vadd.f32 %v527, %v544
    %v561 = vadd.f32 %v528, %v545
    %v562 = vadd.f32 %v529, %v546
    %v563 = vadd.f32 %v530, %v547
    %v564 = vperm.slane %v320, 2
    %v565 = vmul.f32 %v362, %v564
    %v566 = vmul.f32 %v363, %v564
    %v567 = vmul.f32 %v364, %v564
    %v568 = vmul.f32 %v365, %v564
    %v569 = vmul.f32 %v366, %v564
    %v570 = vmul.f32 %v367, %v564
    %v571 = vmul.f32 %v368, %v564
    %v572 = vmul.f32 %v369, %v564
    %v573 = vmul.f32 %v372, %v564
    %v574 = vmul.f32 %v373, %v564
    %v575 = vmul.f32 %v374, %v564
    %v576 = vmul.f32 %v375, %v564
    %v577 = vmul.f32 %v376, %v564
    %v578 = vmul.f32 %v377, %v564
    %v579 = vmul.f32 %v378, %v564
    %v580 = vmul.f32 %v379, %v564
    %v581 = vadd.f32 %v548, %v565
    %v582 = vadd.f32 %v549, %v566
    %v583 = vadd.f32 %v550, %v567
    %v584 = vadd.f32 %v551, %v568
    %v585 = vadd.f32 %v552, %v569
    %v586 = vadd.f32 %v553, %v570
    %v587 = vadd.f32 %v554, %v571
    %v588 = vadd.f32 %v555, %v572
    %v589 = vadd.f32 %v556, %v573
    %v590 = vadd.f32 %v557, %v574
    %v591 = vadd.f32 %v558, %v575
    %v592 = vadd.f32 %v559, %v576
    %v593 = vadd.f32 %v560, %v577
    %v594 = vadd.f32 %v561, %v578
    %v595 = vadd.f32 %v562, %v579
    %v596 = vadd.f32 %v563, %v580
    %v597 = vperm.slane %v320, 5
    %v598 = vmul.f32 %v363, %v597
    %v599 = vmul.f32 %v364, %v597
    %v600 = vmul.f32 %v365, %v597
    %v601 = vmul.f32 %v366, %v597
    %v602 = vmul.f32 %v367, %v597
    %v603 = vmul.f32 %v368, %v597
    %v604 = vmul.f32 %v369, %v597
    %v605 = vmul.f32 %v370, %v597
    %v606 = vmul.f32 %v373, %v597
    %v607 = vmul.f32 %v374, %v597
    %v608 = vmul.f32 %v375, %v597
    %v609 = vmul.f32 %v376, %v597
    %v610 = vmul.f32 %v377, %v597
    %v611 = vmul.f32 %v378, %v597
    %v612 = vmul.f32 %v379, %v597
    %v613 = vmul.f32 %v380, %v597
    %v614 = vadd.f32 %v581, %v598
    %v615 = vadd.f32 %v582, %v599
    %v616 = vadd.f32 %v583, %v600
    %v617 = vadd.f32 %v584, %v601
    %v618 = vadd.f32 %v585, %v602
    %v619 = vadd.f32 %v586, %v603
    %v620 = vadd.f32 %v587, %v604
    %v621 = vadd.f32 %v588, %v605
    %v622 = vadd.f32 %v589, %v606
    %v623 = vadd.f32 %v590, %v607
    %v624 = vadd.f32 %v591, %v608
    %v625 = vadd.f32 %v592, %v609
    %v626 = vadd.f32 %v593, %v610
    %v627 = vadd.f32 %v594, %v611
    %v628 = vadd.f32 %v595, %v612
    %v629 = vadd.f32 %v596, %v613
    %v630 = vperm.slane %v321, 0
    %v631 = vmul.f32 %v364, %v630
    %v632 = vmul.f32 %v365, %v630
    %v633 = vmul.f32 %v366, %v630
    %v634 = vmul.f32 %v367, %v630
    %v635 = vmul.f32 %v368, %v630
    %v636 = vmul.f32 %v369, %v630
    %v637 = vmul.f32 %v370, %v630
    %v638 = vmul.f32 %v371, %v630
    %v639 = vmul.f32 %v374, %v630
    %v640 = vmul.f32 %v375, %v630
    %v641 = vmul.f32 %v376, %v630
    %v642 = vmul.f32 %v377, %v630
    %v643 = vmul.f32 %v378, %v630
    %v644 = vmul.f32 %v379, %v630
    %v645 = vmul.f32 %v380, %v630
    %v646 = vmul.f32 %v381, %v630
    %v647 = vadd.f32 %v614, %v631
    %v648 = vadd.f32 %v615, %v632
    %v649 = vadd.f32 %v616, %v633
    %v650 = vadd.f32 %v617, %v634
    %v651 = vadd.f32 %v618, %v635
    %v652 = vadd.f32 %v619, %v636
    %v653 = vadd.f32 %v620, %v637
    %v654 = vadd.f32 %v621, %v638
    %v655 = vadd.f32 %v622, %v639
    %v656 = vadd.f32 %v623, %v640
    %v657 = vadd.f32 %v624, %v641
    %v658 = vadd.f32 %v625, %v642
    %v659 = vadd.f32 %v626, %v643
    %v660 = vadd.f32 %v627, %v644
    %v661 = vadd.f32 %v628, %v645
    %v662 = vadd.f32 %v629, %v646
    %v663 = vld [vmem:[%s2] sm:$0x1]
    %v665 = vperm.slane %v663, 0
    %v667 = vadd.f32 %v647, %v665
    %v668 = vadd.f32 %v648, %v665
    %v669 = vadd.f32 %v649, %v665
    %v670 = vadd.f32 %v650, %v665
    %v671 = vadd.f32 %v651, %v665
    %v672 = vadd.f32 %v652, %v665
    %v673 = vadd.f32 %v653, %v665
    %v674 = vadd.f32 %v654, %v665
    %v675 = vadd.f32 %v655, %v665
    %v676 = vadd.f32 %v656, %v665
    %v677 = vadd.f32 %v657, %v665
    %v678 = vadd.f32 %v658, %v665
    %v679 = vadd.f32 %v659, %v665
    %v680 = vadd.f32 %v660, %v665
    %v681 = vadd.f32 %v661, %v665
    %v682 = vadd.f32 %v662, %v665
    %v683 = vmax.f32 %v667, 0.0
    %v684 = vmax.f32 %v668, 0.0
    %v685 = vmax.f32 %v669, 0.0
    %v686 = vmax.f32 %v670, 0.0
    %v687 = vmax.f32 %v671, 0.0
    %v688 = vmax.f32 %v672, 0.0
    %v689 = vmax.f32 %v673, 0.0
    %v690 = vmax.f32 %v674, 0.0
    %v691 = vmax.f32 %v675, 0.0
    %v692 = vmax.f32 %v676, 0.0
    %v693 = vmax.f32 %v677, 0.0
    %v694 = vmax.f32 %v678, 0.0
    %v695 = vmax.f32 %v679, 0.0
    %v696 = vmax.f32 %v680, 0.0
    %v697 = vmax.f32 %v681, 0.0
    %v698 = vmax.f32 %v682, 0.0
    %v699 = vpack.c.bf16 %v684, %v683
    %v700 = vpack.c.bf16 %v686, %v685
    %v701 = vpack.c.bf16 %v688, %v687
    %v702 = vpack.c.bf16 %v690, %v689
    %v703 = vpack.c.bf16 %v692, %v691
    %v704 = vpack.c.bf16 %v694, %v693
    %v705 = vpack.c.bf16 %v696, %v695
    %v706 = vpack.c.bf16 %v698, %v697
    %v707 = vld [vmem:[#allocation9] sm:$0xf]
    %v708 = vld [vmem:[#allocation9 + $0x4] sm:$0xf]
    %v709 = vld [vmem:[#allocation9 + $0x8] sm:$0xf]
    %v710 = vld [vmem:[#allocation9 + $0xc] sm:$0xf]
    %v711 = vld [vmem:[#allocation9 + $0x10] sm:$0xf]
    %v712 = vld [vmem:[#allocation9 + $0x14] sm:$0xf]
    %v713 = vld [vmem:[#allocation9 + $0x18] sm:$0xf]
    %v714 = vld [vmem:[#allocation9 + $0x1c] sm:$0xf]
    %v715 = vld [vmem:[%s4] sm:$0x1]
    %v717 = vperm.slane %v715, 0
    %v727 = vunpack.c.l.b16 %v707
    %v728 = vunpack.c.l.b16 %v708
    %v729 = vunpack.c.l.b16 %v709
    %v730 = vunpack.c.l.b16 %v710
    %v731 = vunpack.c.l.b16 %v711
    %v732 = vunpack.c.l.b16 %v712
    %v733 = vunpack.c.l.b16 %v713
    %v734 = vunpack.c.l.b16 %v714
    %v735 = vpack.c.b16 %v728, %v727
    %v736 = vpack.c.b16 %v730, %v729
    %v737 = vpack.c.b16 %v732, %v731
    %v738 = vpack.c.b16 %v734, %v733
    %v744 = vsel %vm259, %v699, 0
    %v747 = vsel %vm259, %v700, 0
    %v750 = vsel %vm259, %v701, 0
    %v753 = vsel %vm259, %v702, 0
    %v756 = vsel %vm259, %v703, 0
    %v759 = vsel %vm259, %v704, 0
    %v762 = vsel %vm259, %v705, 0
    %v765 = vsel %vm259, %v706, 0
    %767 = vmatpush.bf16.msra.mxu0 0
    %768 = vmatpush.bf16.msra.mxu0 0
    %769 = vmatpush.bf16.msra.mxu0 0
    %770 = vmatpush.bf16.msra.mxu0 0
    %771 = vmatpush.bf16.msra.mxu0 %v738
    %772 = vmatpush.bf16.msra.mxu0 %v737
    %773 = vmatpush.bf16.msra.mxu0 %v736
    %774 = vmatpush.bf16.msra.mxu0 %v735
    %775 = vmatmul.bf16.gmra.mxu0 %v744
    %v776 = vpop.f32.mrf.mxu0
    %v777 = vadd.f32 %v717, %v776
    %v778 = vpop.f32.mrf.mxu0
    %v779 = vadd.f32 %v717, %v778
    %780 = vmatmul.bf16.gmra.mxu0 %v747
    %v781 = vpop.f32.mrf.mxu0
    %v782 = vadd.f32 %v717, %v781
    %v783 = vpop.f32.mrf.mxu0
    %v784 = vadd.f32 %v717, %v783
    %785 = vmatmul.bf16.gmra.mxu0 %v750
    %v786 = vpop.f32.mrf.mxu0
    %v787 = vadd.f32 %v717, %v786
    %v788 = vpop.f32.mrf.mxu0
    %v789 = vadd.f32 %v717, %v788
    %790 = vmatmul.bf16.gmra.mxu0 %v753
    %v791 = vpop.f32.mrf.mxu0
    %v792 = vadd.f32 %v717, %v791
    %v793 = vpop.f32.mrf.mxu0
    %v794 = vadd.f32 %v717, %v793
    %795 = vmatmul.bf16.gmra.mxu0 %v756
    %v796 = vpop.f32.mrf.mxu0
    %v797 = vadd.f32 %v717, %v796
    %v798 = vpop.f32.mrf.mxu0
    %v799 = vadd.f32 %v717, %v798
    %800 = vmatmul.bf16.gmra.mxu0 %v759
    %v801 = vpop.f32.mrf.mxu0
    %v802 = vadd.f32 %v717, %v801
    %v803 = vpop.f32.mrf.mxu0
    %v804 = vadd.f32 %v717, %v803
    %805 = vmatmul.bf16.gmra.mxu0 %v762
    %v806 = vpop.f32.mrf.mxu0
    %v807 = vadd.f32 %v717, %v806
    %v808 = vpop.f32.mrf.mxu0
    %v809 = vadd.f32 %v717, %v808
    %810 = vmatmul.bf16.gmra.mxu0 %v765
    %v811 = vpop.f32.mrf.mxu0
    %v812 = vadd.f32 %v717, %v811
    %v813 = vpop.f32.mrf.mxu0
    %v814 = vadd.f32 %v717, %v813
    %815 = vdwg.mxu0
    %v816 = vmax.f32 %v777, 0.0
    %v817 = vmax.f32 %v779, 0.0
    %v818 = vmax.f32 %v782, 0.0
    %v819 = vmax.f32 %v784, 0.0
    %v820 = vmax.f32 %v787, 0.0
    %v821 = vmax.f32 %v789, 0.0
    %v822 = vmax.f32 %v792, 0.0
    %v823 = vmax.f32 %v794, 0.0
    %v824 = vmax.f32 %v797, 0.0
    %v825 = vmax.f32 %v799, 0.0
    %v826 = vmax.f32 %v802, 0.0
    %v827 = vmax.f32 %v804, 0.0
    %v828 = vmax.f32 %v807, 0.0
    %v829 = vmax.f32 %v809, 0.0
    %v830 = vmax.f32 %v812, 0.0
    %v831 = vmax.f32 %v814, 0.0
    %832 = vst [vmem:[#allocation3] sm:$0xff] 0.0
    %833 = vst [vmem:[#allocation3 + $0x8] sm:$0x3] 0.0
    %834 = vst [vmem:[#allocation3 + $0xa0] sm:$0xff] 0.0
    %835 = vst [vmem:[#allocation3 + $0xa8] sm:$0x3] 0.0
    %s836 = scalar_lea.vmem [#allocation3], 144
    %837 = vst [vmem:[%s836] sm:$0xff] 0.0
    %838 = vst [vmem:[%s836 + $0x8] sm:$0x3] 0.0
    %839 = vst [vmem:[%s836 + $0xa0] sm:$0xff] 0.0
    %840 = vst [vmem:[%s836 + $0xa8] sm:$0x3] 0.0
    %s841 = scalar_lea.vmem [#allocation3], 16
    %842 = vst [vmem:[%s841] sm:$0x1] 0.0
    %843 = vst [vmem:[%s841 + $0x10] sm:$0x1] 0.0
    %844 = vst [vmem:[%s841 + $0x20] sm:$0x1] 0.0
    %845 = vst [vmem:[%s841 + $0x30] sm:$0x1] 0.0
    %846 = vst [vmem:[%s841 + $0x40] sm:$0x1] 0.0
    %847 = vst [vmem:[%s841 + $0x50] sm:$0x1] 0.0
    %848 = vst [vmem:[%s841 + $0x60] sm:$0x1] 0.0
    %849 = vst [vmem:[%s841 + $0x70] sm:$0x1] 0.0
    %850 = vst [vmem:[%s841 + $0xa0] sm:$0x1] 0.0
    %851 = vst [vmem:[%s841 + $0xb0] sm:$0x1] 0.0
    %852 = vst [vmem:[%s841 + $0xc0] sm:$0x1] 0.0
    %853 = vst [vmem:[%s841 + $0xd0] sm:$0x1] 0.0
    %854 = vst [vmem:[%s841 + $0xe0] sm:$0x1] 0.0
    %855 = vst [vmem:[%s841 + $0xf0] sm:$0x1] 0.0
    %856 = vst [vmem:[%s841 + $0x100] sm:$0x1] 0.0
    %857 = vst [vmem:[%s841 + $0x110] sm:$0x1] 0.0
    %858 = vst [vmem:[%s841 + $0x9] sm:$0x1] 0.0
    %859 = vst [vmem:[%s841 + $0x19] sm:$0x1] 0.0
    %860 = vst [vmem:[%s841 + $0x29] sm:$0x1] 0.0
    %861 = vst [vmem:[%s841 + $0x39] sm:$0x1] 0.0
    %862 = vst [vmem:[%s841 + $0x49] sm:$0x1] 0.0
    %863 = vst [vmem:[%s841 + $0x59] sm:$0x1] 0.0
    %864 = vst [vmem:[%s841 + $0x69] sm:$0x1] 0.0
    %865 = vst [vmem:[%s841 + $0x79] sm:$0x1] 0.0
    %866 = vst [vmem:[%s841 + $0xa9] sm:$0x1] 0.0
    %867 = vst [vmem:[%s841 + $0xb9] sm:$0x1] 0.0
    %868 = vst [vmem:[%s841 + $0xc9] sm:$0x1] 0.0
    %869 = vst [vmem:[%s841 + $0xd9] sm:$0x1] 0.0
    %870 = vst [vmem:[%s841 + $0xe9] sm:$0x1] 0.0
    %871 = vst [vmem:[%s841 + $0xf9] sm:$0x1] 0.0
    %872 = vst [vmem:[%s841 + $0x109] sm:$0x1] 0.0
    %873 = vst [vmem:[%s841 + $0x119] sm:$0x1] 0.0
    %874 = vst [vmem:[%s841 + $0x1] sm:$0xff] %v816
    %875 = vst [vmem:[%s841 + $0x11] sm:$0xff] %v817
    %876 = vst [vmem:[%s841 + $0x21] sm:$0xff] %v818
    %877 = vst [vmem:[%s841 + $0x31] sm:$0xff] %v819
    %878 = vst [vmem:[%s841 + $0x41] sm:$0xff] %v820
    %879 = vst [vmem:[%s841 + $0x51] sm:$0xff] %v821
    %880 = vst [vmem:[%s841 + $0x61] sm:$0xff] %v822
    %881 = vst [vmem:[%s841 + $0x71] sm:$0xff] %v823
    %882 = vst [vmem:[%s841 + $0xa1] sm:$0xff] %v824
    %883 = vst [vmem:[%s841 + $0xb1] sm:$0xff] %v825
    %884 = vst [vmem:[%s841 + $0xc1] sm:$0xff] %v826
    %885 = vst [vmem:[%s841 + $0xd1] sm:$0xff] %v827
    %886 = vst [vmem:[%s841 + $0xe1] sm:$0xff] %v828
    %887 = vst [vmem:[%s841 + $0xf1] sm:$0xff] %v829
    %888 = vst [vmem:[%s841 + $0x101] sm:$0xff] %v830
    %889 = vst [vmem:[%s841 + $0x111] sm:$0xff] %v831
    %v890 = vld [vmem:[#allocation10] sm:$0xff]
    %v891 = vld [vmem:[#allocation10 + $0x8] sm:$0x1]
    %v892 = vld [vmem:[#allocation3] sm:$0xff]
    %v893 = vld [vmem:[#allocation3 + $0x10] sm:$0xff]
    %v894 = vld [vmem:[#allocation3 + $0x20] sm:$0xff]
    %v895 = vld [vmem:[#allocation3 + $0x30] sm:$0xff]
    %v896 = vld [vmem:[#allocation3 + $0x40] sm:$0xff]
    %v897 = vld [vmem:[#allocation3 + $0x50] sm:$0xff]
    %v898 = vld [vmem:[#allocation3 + $0x60] sm:$0xff]
    %v899 = vld [vmem:[#allocation3 + $0x70] sm:$0xff]
    %v900 = vld [vmem:[#allocation3 + $0x80] sm:$0xff]
    %v901 = vld [vmem:[#allocation3 + $0x90] sm:$0xff]
    %v902 = vld [vmem:[#allocation3 + $0xa0] sm:$0xff]
    %v903 = vld [vmem:[#allocation3 + $0xb0] sm:$0xff]
    %v904 = vld [vmem:[#allocation3 + $0xc0] sm:$0xff]
    %v905 = vld [vmem:[#allocation3 + $0xd0] sm:$0xff]
    %v906 = vld [vmem:[#allocation3 + $0xe0] sm:$0xff]
    %v907 = vld [vmem:[#allocation3 + $0xf0] sm:$0xff]
    %v908 = vld [vmem:[#allocation3 + $0x100] sm:$0xff]
    %v909 = vld [vmem:[#allocation3 + $0x110] sm:$0xff]
    %v910 = vld [vmem:[#allocation3 + $0x120] sm:$0xff]
    %v911 = vld [vmem:[#allocation3 + $0x130] sm:$0xff]
    %v912 = vld [vmem:[#allocation3 + $0x1] sm:$0xff]
    %v913 = vld [vmem:[#allocation3 + $0x11] sm:$0xff]
    %v914 = vld [vmem:[#allocation3 + $0x21] sm:$0xff]
    %v915 = vld [vmem:[#allocation3 + $0x31] sm:$0xff]
    %v916 = vld [vmem:[#allocation3 + $0x41] sm:$0xff]
    %v917 = vld [vmem:[#allocation3 + $0x51] sm:$0xff]
    %v918 = vld [vmem:[#allocation3 + $0x61] sm:$0xff]
    %v919 = vld [vmem:[#allocation3 + $0x71] sm:$0xff]
    %v920 = vld [vmem:[#allocation3 + $0x81] sm:$0xff]
    %v921 = vld [vmem:[#allocation3 + $0x91] sm:$0xff]
    %v922 = vld [vmem:[#allocation3 + $0xa1] sm:$0xff]
    %v923 = vld [vmem:[#allocation3 + $0xb1] sm:$0xff]
    %v924 = vld [vmem:[#allocation3 + $0xc1] sm:$0xff]
    %v925 = vld [vmem:[#allocation3 + $0xd1] sm:$0xff]
    %v926 = vld [vmem:[#allocation3 + $0xe1] sm:$0xff]
    %v927 = vld [vmem:[#allocation3 + $0xf1] sm:$0xff]
    %v928 = vld [vmem:[#allocation3 + $0x101] sm:$0xff]
    %v929 = vld [vmem:[#allocation3 + $0x111] sm:$0xff]
    %v930 = vld [vmem:[#allocation3 + $0x121] sm:$0xff]
    %v931 = vld [vmem:[#allocation3 + $0x131] sm:$0xff]
    %v932 = vld [vmem:[#allocation3 + $0x2] sm:$0xff]
    %v933 = vld [vmem:[#allocation3 + $0x12] sm:$0xff]
    %v934 = vld [vmem:[#allocation3 + $0x22] sm:$0xff]
    %v935 = vld [vmem:[#allocation3 + $0x32] sm:$0xff]
    %v936 = vld [vmem:[#allocation3 + $0x42] sm:$0xff]
    %v937 = vld [vmem:[#allocation3 + $0x52] sm:$0xff]
    %v938 = vld [vmem:[#allocation3 + $0x62] sm:$0xff]
    %v939 = vld [vmem:[#allocation3 + $0x72] sm:$0xff]
    %v940 = vld [vmem:[#allocation3 + $0x82] sm:$0xff]
    %v941 = vld [vmem:[#allocation3 + $0x92] sm:$0xff]
    %v942 = vld [vmem:[#allocation3 + $0xa2] sm:$0xff]
    %v943 = vld [vmem:[#allocation3 + $0xb2] sm:$0xff]
    %v944 = vld [vmem:[#allocation3 + $0xc2] sm:$0xff]
    %v945 = vld [vmem:[#allocation3 + $0xd2] sm:$0xff]
    %v946 = vld [vmem:[#allocation3 + $0xe2] sm:$0xff]
    %v947 = vld [vmem:[#allocation3 + $0xf2] sm:$0xff]
    %v948 = vld [vmem:[#allocation3 + $0x102] sm:$0xff]
    %v949 = vld [vmem:[#allocation3 + $0x112] sm:$0xff]
    %v950 = vld [vmem:[#allocation3 + $0x122] sm:$0xff]
    %v951 = vld [vmem:[#allocation3 + $0x132] sm:$0xff]
    %v952 = vperm.slane %v890, 0
    %v953 = vmul.f32 %v892, %v952
    %v954 = vmul.f32 %v893, %v952
    %v955 = vmul.f32 %v894, %v952
    %v956 = vmul.f32 %v895, %v952
    %v957 = vmul.f32 %v896, %v952
    %v958 = vmul.f32 %v897, %v952
    %v959 = vmul.f32 %v898, %v952
    %v960 = vmul.f32 %v899, %v952
    %v961 = vmul.f32 %v902, %v952
    %v962 = vmul.f32 %v903, %v952
    %v963 = vmul.f32 %v904, %v952
    %v964 = vmul.f32 %v905, %v952
    %v965 = vmul.f32 %v906, %v952
    %v966 = vmul.f32 %v907, %v952
    %v967 = vmul.f32 %v908, %v952
    %v968 = vmul.f32 %v909, %v952
    %v969 = vperm.slane %v890, 3
    %v970 = vmul.f32 %v893, %v969
    %v971 = vmul.f32 %v894, %v969
    %v972 = vmul.f32 %v895, %v969
    %v973 = vmul.f32 %v896, %v969
    %v974 = vmul.f32 %v897, %v969
    %v975 = vmul.f32 %v898, %v969
    %v976 = vmul.f32 %v899, %v969
    %v977 = vmul.f32 %v900, %v969
    %v978 = vmul.f32 %v903, %v969
    %v979 = vmul.f32 %v904, %v969
    %v980 = vmul.f32 %v905, %v969
    %v981 = vmul.f32 %v906, %v969
    %v982 = vmul.f32 %v907, %v969
    %v983 = vmul.f32 %v908, %v969
    %v984 = vmul.f32 %v909, %v969
    %v985 = vmul.f32 %v910, %v969
    %v986 = vadd.f32 %v953, %v970
    %v987 = vadd.f32 %v954, %v971
    %v988 = vadd.f32 %v955, %v972
    %v989 = vadd.f32 %v956, %v973
    %v990 = vadd.f32 %v957, %v974
    %v991 = vadd.f32 %v958, %v975
    %v992 = vadd.f32 %v959, %v976
    %v993 = vadd.f32 %v960, %v977
    %v994 = vadd.f32 %v961, %v978
    %v995 = vadd.f32 %v962, %v979
    %v996 = vadd.f32 %v963, %v980
    %v997 = vadd.f32 %v964, %v981
    %v998 = vadd.f32 %v965, %v982
    %v999 = vadd.f32 %v966, %v983
    %v1000 = vadd.f32 %v967, %v984
    %v1001 = vadd.f32 %v968, %v985
    %v1002 = vperm.slane %v890, 6
    %v1003 = vmul.f32 %v894, %v1002
    %v1004 = vmul.f32 %v895, %v1002
    %v1005 = vmul.f32 %v896, %v1002
    %v1006 = vmul.f32 %v897, %v1002
    %v1007 = vmul.f32 %v898, %v1002
    %v1008 = vmul.f32 %v899, %v1002
    %v1009 = vmul.f32 %v900, %v1002
    %v1010 = vmul.f32 %v901, %v1002
    %v1011 = vmul.f32 %v904, %v1002
    %v1012 = vmul.f32 %v905, %v1002
    %v1013 = vmul.f32 %v906, %v1002
    %v1014 = vmul.f32 %v907, %v1002
    %v1015 = vmul.f32 %v908, %v1002
    %v1016 = vmul.f32 %v909, %v1002
    %v1017 = vmul.f32 %v910, %v1002
    %v1018 = vmul.f32 %v911, %v1002
    %v1019 = vadd.f32 %v986, %v1003
    %v1020 = vadd.f32 %v987, %v1004
    %v1021 = vadd.f32 %v988, %v1005
    %v1022 = vadd.f32 %v989, %v1006
    %v1023 = vadd.f32 %v990, %v1007
    %v1024 = vadd.f32 %v991, %v1008
    %v1025 = vadd.f32 %v992, %v1009
    %v1026 = vadd.f32 %v993, %v1010
    %v1027 = vadd.f32 %v994, %v1011
    %v1028 = vadd.f32 %v995, %v1012
    %v1029 = vadd.f32 %v996, %v1013
    %v1030 = vadd.f32 %v997, %v1014
    %v1031 = vadd.f32 %v998, %v1015
    %v1032 = vadd.f32 %v999, %v1016
    %v1033 = vadd.f32 %v1000, %v1017
    %v1034 = vadd.f32 %v1001, %v1018
    %v1035 = vperm.slane %v890, 1
    %v1036 = vmul.f32 %v912, %v1035
    %v1037 = vmul.f32 %v913, %v1035
    %v1038 = vmul.f32 %v914, %v1035
    %v1039 = vmul.f32 %v915, %v1035
    %v1040 = vmul.f32 %v916, %v1035
    %v1041 = vmul.f32 %v917, %v1035
    %v1042 = vmul.f32 %v918, %v1035
    %v1043 = vmul.f32 %v919, %v1035
    %v1044 = vmul.f32 %v922, %v1035
    %v1045 = vmul.f32 %v923, %v1035
    %v1046 = vmul.f32 %v924, %v1035
    %v1047 = vmul.f32 %v925, %v1035
    %v1048 = vmul.f32 %v926, %v1035
    %v1049 = vmul.f32 %v927, %v1035
    %v1050 = vmul.f32 %v928, %v1035
    %v1051 = vmul.f32 %v929, %v1035
    %v1052 = vadd.f32 %v1019, %v1036
    %v1053 = vadd.f32 %v1020, %v1037
    %v1054 = vadd.f32 %v1021, %v1038
    %v1055 = vadd.f32 %v1022, %v1039
    %v1056 = vadd.f32 %v1023, %v1040
    %v1057 = vadd.f32 %v1024, %v1041
    %v1058 = vadd.f32 %v1025, %v1042
    %v1059 = vadd.f32 %v1026, %v1043
    %v1060 = vadd.f32 %v1027, %v1044
    %v1061 = vadd.f32 %v1028, %v1045
    %v1062 = vadd.f32 %v1029, %v1046
    %v1063 = vadd.f32 %v1030, %v1047
    %v1064 = vadd.f32 %v1031, %v1048
    %v1065 = vadd.f32 %v1032, %v1049
    %v1066 = vadd.f32 %v1033, %v1050
    %v1067 = vadd.f32 %v1034, %v1051
    %v1068 = vperm.slane %v890, 4
    %v1069 = vmul.f32 %v913, %v1068
    %v1070 = vmul.f32 %v914, %v1068
    %v1071 = vmul.f32 %v915, %v1068
    %v1072 = vmul.f32 %v916, %v1068
    %v1073 = vmul.f32 %v917, %v1068
    %v1074 = vmul.f32 %v918, %v1068
    %v1075 = vmul.f32 %v919, %v1068
    %v1076 = vmul.f32 %v920, %v1068
    %v1077 = vmul.f32 %v923, %v1068
    %v1078 = vmul.f32 %v924, %v1068
    %v1079 = vmul.f32 %v925, %v1068
    %v1080 = vmul.f32 %v926, %v1068
    %v1081 = vmul.f32 %v927, %v1068
    %v1082 = vmul.f32 %v928, %v1068
    %v1083 = vmul.f32 %v929, %v1068
    %v1084 = vmul.f32 %v930, %v1068
    %v1085 = vadd.f32 %v1052, %v1069
    %v1086 = vadd.f32 %v1053, %v1070
    %v1087 = vadd.f32 %v1054, %v1071
    %v1088 = vadd.f32 %v1055, %v1072
    %v1089 = vadd.f32 %v1056, %v1073
    %v1090 = vadd.f32 %v1057, %v1074
    %v1091 = vadd.f32 %v1058, %v1075
    %v1092 = vadd.f32 %v1059, %v1076
    %v1093 = vadd.f32 %v1060, %v1077
    %v1094 = vadd.f32 %v1061, %v1078
    %v1095 = vadd.f32 %v1062, %v1079
    %v1096 = vadd.f32 %v1063, %v1080
    %v1097 = vadd.f32 %v1064, %v1081
    %v1098 = vadd.f32 %v1065, %v1082
    %v1099 = vadd.f32 %v1066, %v1083
    %v1100 = vadd.f32 %v1067, %v1084
    %v1101 = vperm.slane %v890, 7
    %v1102 = vmul.f32 %v914, %v1101
    %v1103 = vmul.f32 %v915, %v1101
    %v1104 = vmul.f32 %v916, %v1101
    %v1105 = vmul.f32 %v917, %v1101
    %v1106 = vmul.f32 %v918, %v1101
    %v1107 = vmul.f32 %v919, %v1101
    %v1108 = vmul.f32 %v920, %v1101
    %v1109 = vmul.f32 %v921, %v1101
    %v1110 = vmul.f32 %v924, %v1101
    %v1111 = vmul.f32 %v925, %v1101
    %v1112 = vmul.f32 %v926, %v1101
    %v1113 = vmul.f32 %v927, %v1101
    %v1114 = vmul.f32 %v928, %v1101
    %v1115 = vmul.f32 %v929, %v1101
    %v1116 = vmul.f32 %v930, %v1101
    %v1117 = vmul.f32 %v931, %v1101
    %v1118 = vadd.f32 %v1085, %v1102
    %v1119 = vadd.f32 %v1086, %v1103
    %v1120 = vadd.f32 %v1087, %v1104
    %v1121 = vadd.f32 %v1088, %v1105
    %v1122 = vadd.f32 %v1089, %v1106
    %v1123 = vadd.f32 %v1090, %v1107
    %v1124 = vadd.f32 %v1091, %v1108
    %v1125 = vadd.f32 %v1092, %v1109
    %v1126 = vadd.f32 %v1093, %v1110
    %v1127 = vadd.f32 %v1094, %v1111
    %v1128 = vadd.f32 %v1095, %v1112
    %v1129 = vadd.f32 %v1096, %v1113
    %v1130 = vadd.f32 %v1097, %v1114
    %v1131 = vadd.f32 %v1098, %v1115
    %v1132 = vadd.f32 %v1099, %v1116
    %v1133 = vadd.f32 %v1100, %v1117
    %v1134 = vperm.slane %v890, 2
    %v1135 = vmul.f32 %v932, %v1134
    %v1136 = vmul.f32 %v933, %v1134
    %v1137 = vmul.f32 %v934, %v1134
    %v1138 = vmul.f32 %v935, %v1134
    %v1139 = vmul.f32 %v936, %v1134
    %v1140 = vmul.f32 %v937, %v1134
    %v1141 = vmul.f32 %v938, %v1134
    %v1142 = vmul.f32 %v939, %v1134
    %v1143 = vmul.f32 %v942, %v1134
    %v1144 = vmul.f32 %v943, %v1134
    %v1145 = vmul.f32 %v944, %v1134
    %v1146 = vmul.f32 %v945, %v1134
    %v1147 = vmul.f32 %v946, %v1134
    %v1148 = vmul.f32 %v947, %v1134
    %v1149 = vmul.f32 %v948, %v1134
    %v1150 = vmul.f32 %v949, %v1134
    %v1151 = vadd.f32 %v1118, %v1135
    %v1152 = vadd.f32 %v1119, %v1136
    %v1153 = vadd.f32 %v1120, %v1137
    %v1154 = vadd.f32 %v1121, %v1138
    %v1155 = vadd.f32 %v1122, %v1139
    %v1156 = vadd.f32 %v1123, %v1140
    %v1157 = vadd.f32 %v1124, %v1141
    %v1158 = vadd.f32 %v1125, %v1142
    %v1159 = vadd.f32 %v1126, %v1143
    %v1160 = vadd.f32 %v1127, %v1144
    %v1161 = vadd.f32 %v1128, %v1145
    %v1162 = vadd.f32 %v1129, %v1146
    %v1163 = vadd.f32 %v1130, %v1147
    %v1164 = vadd.f32 %v1131, %v1148
    %v1165 = vadd.f32 %v1132, %v1149
    %v1166 = vadd.f32 %v1133, %v1150
    %v1167 = vperm.slane %v890, 5
    %v1168 = vmul.f32 %v933, %v1167
    %v1169 = vmul.f32 %v934, %v1167
    %v1170 = vmul.f32 %v935, %v1167
    %v1171 = vmul.f32 %v936, %v1167
    %v1172 = vmul.f32 %v937, %v1167
    %v1173 = vmul.f32 %v938, %v1167
    %v1174 = vmul.f32 %v939, %v1167
    %v1175 = vmul.f32 %v940, %v1167
    %v1176 = vmul.f32 %v943, %v1167
    %v1177 = vmul.f32 %v944, %v1167
    %v1178 = vmul.f32 %v945, %v1167
    %v1179 = vmul.f32 %v946, %v1167
    %v1180 = vmul.f32 %v947, %v1167
    %v1181 = vmul.f32 %v948, %v1167
    %v1182 = vmul.f32 %v949, %v1167
    %v1183 = vmul.f32 %v950, %v1167
    %v1184 = vadd.f32 %v1151, %v1168
    %v1185 = vadd.f32 %v1152, %v1169
    %v1186 = vadd.f32 %v1153, %v1170
    %v1187 = vadd.f32 %v1154, %v1171
    %v1188 = vadd.f32 %v1155, %v1172
    %v1189 = vadd.f32 %v1156, %v1173
    %v1190 = vadd.f32 %v1157, %v1174
    %v1191 = vadd.f32 %v1158, %v1175
    %v1192 = vadd.f32 %v1159, %v1176
    %v1193 = vadd.f32 %v1160, %v1177
    %v1194 = vadd.f32 %v1161, %v1178
    %v1195 = vadd.f32 %v1162, %v1179
    %v1196 = vadd.f32 %v1163, %v1180
    %v1197 = vadd.f32 %v1164, %v1181
    %v1198 = vadd.f32 %v1165, %v1182
    %v1199 = vadd.f32 %v1166, %v1183
    %v1200 = vperm.slane %v891, 0
    %v1201 = vmul.f32 %v934, %v1200
    %v1202 = vmul.f32 %v935, %v1200
    %v1203 = vmul.f32 %v936, %v1200
    %v1204 = vmul.f32 %v937, %v1200
    %v1205 = vmul.f32 %v938, %v1200
    %v1206 = vmul.f32 %v939, %v1200
    %v1207 = vmul.f32 %v940, %v1200
    %v1208 = vmul.f32 %v941, %v1200
    %v1209 = vmul.f32 %v944, %v1200
    %v1210 = vmul.f32 %v945, %v1200
    %v1211 = vmul.f32 %v946, %v1200
    %v1212 = vmul.f32 %v947, %v1200
    %v1213 = vmul.f32 %v948, %v1200
    %v1214 = vmul.f32 %v949, %v1200
    %v1215 = vmul.f32 %v950, %v1200
    %v1216 = vmul.f32 %v951, %v1200
    %v1217 = vadd.f32 %v1184, %v1201
    %v1218 = vadd.f32 %v1185, %v1202
    %v1219 = vadd.f32 %v1186, %v1203
    %v1220 = vadd.f32 %v1187, %v1204
    %v1221 = vadd.f32 %v1188, %v1205
    %v1222 = vadd.f32 %v1189, %v1206
    %v1223 = vadd.f32 %v1190, %v1207
    %v1224 = vadd.f32 %v1191, %v1208
    %v1225 = vadd.f32 %v1192, %v1209
    %v1226 = vadd.f32 %v1193, %v1210
    %v1227 = vadd.f32 %v1194, %v1211
    %v1228 = vadd.f32 %v1195, %v1212
    %v1229 = vadd.f32 %v1196, %v1213
    %v1230 = vadd.f32 %v1197, %v1214
    %v1231 = vadd.f32 %v1198, %v1215
    %v1232 = vadd.f32 %v1199, %v1216
    %v1233 = vld [vmem:[%s6] sm:$0x1]
    %v1235 = vperm.slane %v1233, 0
    %v1237 = vadd.f32 %v1217, %v1235
    %v1238 = vadd.f32 %v1218, %v1235
    %v1239 = vadd.f32 %v1219, %v1235
    %v1240 = vadd.f32 %v1220, %v1235
    %v1241 = vadd.f32 %v1221, %v1235
    %v1242 = vadd.f32 %v1222, %v1235
    %v1243 = vadd.f32 %v1223, %v1235
    %v1244 = vadd.f32 %v1224, %v1235
    %v1245 = vadd.f32 %v1225, %v1235
    %v1246 = vadd.f32 %v1226, %v1235
    %v1247 = vadd.f32 %v1227, %v1235
    %v1248 = vadd.f32 %v1228, %v1235
    %v1249 = vadd.f32 %v1229, %v1235
    %v1250 = vadd.f32 %v1230, %v1235
    %v1251 = vadd.f32 %v1231, %v1235
    %v1252 = vadd.f32 %v1232, %v1235
    %v1253 = vmax.f32 %v1237, 0.0
    %v1254 = vmax.f32 %v1238, 0.0
    %v1255 = vmax.f32 %v1239, 0.0
    %v1256 = vmax.f32 %v1240, 0.0
    %v1257 = vmax.f32 %v1241, 0.0
    %v1258 = vmax.f32 %v1242, 0.0
    %v1259 = vmax.f32 %v1243, 0.0
    %v1260 = vmax.f32 %v1244, 0.0
    %v1261 = vmax.f32 %v1245, 0.0
    %v1262 = vmax.f32 %v1246, 0.0
    %v1263 = vmax.f32 %v1247, 0.0
    %v1264 = vmax.f32 %v1248, 0.0
    %v1265 = vmax.f32 %v1249, 0.0
    %v1266 = vmax.f32 %v1250, 0.0
    %v1267 = vmax.f32 %v1251, 0.0
    %v1268 = vmax.f32 %v1252, 0.0
    %v1269 = vpack.c.bf16 %v1254, %v1253
    %v1270 = vpack.c.bf16 %v1256, %v1255
    %v1271 = vpack.c.bf16 %v1258, %v1257
    %v1272 = vpack.c.bf16 %v1260, %v1259
    %v1273 = vpack.c.bf16 %v1262, %v1261
    %v1274 = vpack.c.bf16 %v1264, %v1263
    %v1275 = vpack.c.bf16 %v1266, %v1265
    %v1276 = vpack.c.bf16 %v1268, %v1267
    %v1277 = vld [vmem:[#allocation12] sm:$0xf]
    %v1278 = vld [vmem:[#allocation12 + $0x4] sm:$0xf]
    %v1279 = vld [vmem:[#allocation12 + $0x8] sm:$0xf]
    %v1280 = vld [vmem:[#allocation12 + $0xc] sm:$0xf]
    %v1281 = vld [vmem:[#allocation12 + $0x10] sm:$0xf]
    %v1282 = vld [vmem:[#allocation12 + $0x14] sm:$0xf]
    %v1283 = vld [vmem:[#allocation12 + $0x18] sm:$0xf]
    %v1284 = vld [vmem:[#allocation12 + $0x1c] sm:$0xf]
    %v1285 = vld [vmem:[#allocation12 + $0x20] sm:$0xf]
    %v1286 = vld [vmem:[#allocation12 + $0x24] sm:$0xf]
    %v1287 = vld [vmem:[#allocation12 + $0x28] sm:$0xf]
    %v1288 = vld [vmem:[#allocation12 + $0x2c] sm:$0xf]
    %v1289 = vld [vmem:[#allocation12 + $0x30] sm:$0xf]
    %v1290 = vld [vmem:[#allocation12 + $0x34] sm:$0xf]
    %v1291 = vld [vmem:[#allocation12 + $0x38] sm:$0xf]
    %v1292 = vld [vmem:[#allocation12 + $0x3c] sm:$0xf]
    %v1293 = vld [vmem:[%s8] sm:$0x1]
    %v1295 = vperm.slane %v1293, 0
    %v1313 = vunpack.c.l.b16 %v1277
    %v1314 = vunpack.c.l.b16 %v1278
    %v1315 = vunpack.c.l.b16 %v1279
    %v1316 = vunpack.c.l.b16 %v1280
    %v1317 = vunpack.c.l.b16 %v1281
    %v1318 = vunpack.c.l.b16 %v1282
    %v1319 = vunpack.c.l.b16 %v1283
    %v1320 = vunpack.c.l.b16 %v1284
    %v1321 = vunpack.c.l.b16 %v1285
    %v1322 = vunpack.c.l.b16 %v1286
    %v1323 = vunpack.c.l.b16 %v1287
    %v1324 = vunpack.c.l.b16 %v1288
    %v1325 = vunpack.c.l.b16 %v1289
    %v1326 = vunpack.c.l.b16 %v1290
    %v1327 = vunpack.c.l.b16 %v1291
    %v1328 = vunpack.c.l.b16 %v1292
    %v1329 = vpack.c.b16 %v1314, %v1313
    %v1330 = vpack.c.b16 %v1316, %v1315
    %v1331 = vpack.c.b16 %v1318, %v1317
    %v1332 = vpack.c.b16 %v1320, %v1319
    %v1333 = vpack.c.b16 %v1322, %v1321
    %v1334 = vpack.c.b16 %v1324, %v1323
    %v1335 = vpack.c.b16 %v1326, %v1325
    %v1336 = vpack.c.b16 %v1328, %v1327
    %1345 = vmatpush.bf16.msra.mxu0 %v1336
    %1346 = vmatpush.bf16.msra.mxu0 %v1335
    %1347 = vmatpush.bf16.msra.mxu0 %v1334
    %1348 = vmatpush.bf16.msra.mxu0 %v1333
    %1349 = vmatpush.bf16.msra.mxu0 %v1332
    %1350 = vmatpush.bf16.msra.mxu0 %v1331
    %1351 = vmatpush.bf16.msra.mxu0 %v1330
    %1352 = vmatpush.bf16.msra.mxu0 %v1329
    %1353 = vmatmul.bf16.gmra.mxu0 %v1269
    %v1354 = vpop.f32.mrf.mxu0
    %v1355 = vadd.f32 %v1295, %v1354
    %v1356 = vpop.f32.mrf.mxu0
    %v1357 = vadd.f32 %v1295, %v1356
    %1358 = vmatmul.bf16.gmra.mxu0 %v1270
    %v1359 = vpop.f32.mrf.mxu0
    %v1360 = vadd.f32 %v1295, %v1359
    %v1361 = vpop.f32.mrf.mxu0
    %v1362 = vadd.f32 %v1295, %v1361
    %1363 = vmatmul.bf16.gmra.mxu0 %v1271
    %v1364 = vpop.f32.mrf.mxu0
    %v1365 = vadd.f32 %v1295, %v1364
    %v1366 = vpop.f32.mrf.mxu0
    %v1367 = vadd.f32 %v1295, %v1366
    %1368 = vmatmul.bf16.gmra.mxu0 %v1272
    %v1369 = vpop.f32.mrf.mxu0
    %v1370 = vadd.f32 %v1295, %v1369
    %v1371 = vpop.f32.mrf.mxu0
    %v1372 = vadd.f32 %v1295, %v1371
    %1373 = vmatmul.bf16.gmra.mxu0 %v1273
    %v1374 = vpop.f32.mrf.mxu0
    %v1375 = vadd.f32 %v1295, %v1374
    %v1376 = vpop.f32.mrf.mxu0
    %v1377 = vadd.f32 %v1295, %v1376
    %1378 = vmatmul.bf16.gmra.mxu0 %v1274
    %v1379 = vpop.f32.mrf.mxu0
    %v1380 = vadd.f32 %v1295, %v1379
    %v1381 = vpop.f32.mrf.mxu0
    %v1382 = vadd.f32 %v1295, %v1381
    %1383 = vmatmul.bf16.gmra.mxu0 %v1275
    %v1384 = vpop.f32.mrf.mxu0
    %v1385 = vadd.f32 %v1295, %v1384
    %v1386 = vpop.f32.mrf.mxu0
    %v1387 = vadd.f32 %v1295, %v1386
    %1388 = vmatmul.bf16.gmra.mxu0 %v1276
    %v1389 = vpop.f32.mrf.mxu0
    %v1390 = vadd.f32 %v1295, %v1389
    %v1391 = vpop.f32.mrf.mxu0
    %v1392 = vadd.f32 %v1295, %v1391
    %1393 = vdwg.mxu0
    %v1394 = vmax.f32 %v1355, 0.0
    %v1395 = vmax.f32 %v1357, 0.0
    %v1396 = vmax.f32 %v1360, 0.0
    %v1397 = vmax.f32 %v1362, 0.0
    %v1398 = vmax.f32 %v1365, 0.0
    %v1399 = vmax.f32 %v1367, 0.0
    %v1400 = vmax.f32 %v1370, 0.0
    %v1401 = vmax.f32 %v1372, 0.0
    %v1402 = vmax.f32 %v1375, 0.0
    %v1403 = vmax.f32 %v1377, 0.0
    %v1404 = vmax.f32 %v1380, 0.0
    %v1405 = vmax.f32 %v1382, 0.0
    %v1406 = vmax.f32 %v1385, 0.0
    %v1407 = vmax.f32 %v1387, 0.0
    %v1408 = vmax.f32 %v1390, 0.0
    %v1409 = vmax.f32 %v1392, 0.0
    %v1410 = vpack.c.bf16 %v244, %v243
    %v1411 = vpack.c.bf16 %v246, %v245
    %v1412 = vpack.c.bf16 %v248, %v247
    %v1413 = vpack.c.bf16 %v250, %v249
    %v1414 = vpack.c.bf16 %v252, %v251
    %v1415 = vpack.c.bf16 %v254, %v253
    %v1416 = vpack.c.bf16 %v256, %v255
    %v1417 = vpack.c.bf16 %v258, %v257
    %v1418 = vld [vmem:[#allocation13] sm:$0xf]
    %v1419 = vld [vmem:[#allocation13 + $0x4] sm:$0xf]
    %v1420 = vld [vmem:[#allocation13 + $0x8] sm:$0xf]
    %v1421 = vld [vmem:[#allocation13 + $0xc] sm:$0xf]
    %v1422 = vld [vmem:[#allocation13 + $0x10] sm:$0xf]
    %v1423 = vld [vmem:[#allocation13 + $0x14] sm:$0xf]
    %v1424 = vld [vmem:[#allocation13 + $0x18] sm:$0xf]
    %v1425 = vld [vmem:[#allocation13 + $0x1c] sm:$0xf]
    %v1434 = vunpack.c.l.b16 %v1418
    %v1435 = vunpack.c.l.b16 %v1419
    %v1436 = vunpack.c.l.b16 %v1420
    %v1437 = vunpack.c.l.b16 %v1421
    %v1438 = vunpack.c.l.b16 %v1422
    %v1439 = vunpack.c.l.b16 %v1423
    %v1440 = vunpack.c.l.b16 %v1424
    %v1441 = vunpack.c.l.b16 %v1425
    %v1442 = vpack.c.b16 %v1435, %v1434
    %v1443 = vpack.c.b16 %v1437, %v1436
    %v1444 = vpack.c.b16 %v1439, %v1438
    %v1445 = vpack.c.b16 %v1441, %v1440
    %v1451 = vsel %vm259, %v1410, 0
    %v1454 = vsel %vm259, %v1411, 0
    %v1457 = vsel %vm259, %v1412, 0
    %v1460 = vsel %vm259, %v1413, 0
    %v1463 = vsel %vm259, %v1414, 0
    %v1466 = vsel %vm259, %v1415, 0
    %v1469 = vsel %vm259, %v1416, 0
    %v1472 = vsel %vm259, %v1417, 0
    %1474 = vmatpush.bf16.msra.mxu0 0
    %1475 = vmatpush.bf16.msra.mxu0 0
    %1476 = vmatpush.bf16.msra.mxu0 0
    %1477 = vmatpush.bf16.msra.mxu0 0
    %1478 = vmatpush.bf16.msra.mxu0 %v1445
    %1479 = vmatpush.bf16.msra.mxu0 %v1444
    %1480 = vmatpush.bf16.msra.mxu0 %v1443
    %1481 = vmatpush.bf16.msra.mxu0 %v1442
    %1482 = vmatmul.bf16.gmra.mxu0 %v1451
    %v1483 = vpop.f32.mrf.mxu0
    %v1484 = vadd.f32 %v1394, %v1483
    %v1485 = vpop.f32.mrf.mxu0
    %v1486 = vadd.f32 %v1395, %v1485
    %1487 = vmatmul.bf16.gmra.mxu0 %v1454
    %v1488 = vpop.f32.mrf.mxu0
    %v1489 = vadd.f32 %v1396, %v1488
    %v1490 = vpop.f32.mrf.mxu0
    %v1491 = vadd.f32 %v1397, %v1490
    %1492 = vmatmul.bf16.gmra.mxu0 %v1457
    %v1493 = vpop.f32.mrf.mxu0
    %v1494 = vadd.f32 %v1398, %v1493
    %v1495 = vpop.f32.mrf.mxu0
    %v1496 = vadd.f32 %v1399, %v1495
    %1497 = vmatmul.bf16.gmra.mxu0 %v1460
    %v1498 = vpop.f32.mrf.mxu0
    %v1499 = vadd.f32 %v1400, %v1498
    %v1500 = vpop.f32.mrf.mxu0
    %v1501 = vadd.f32 %v1401, %v1500
    %1502 = vmatmul.bf16.gmra.mxu0 %v1463
    %v1503 = vpop.f32.mrf.mxu0
    %v1504 = vadd.f32 %v1402, %v1503
    %v1505 = vpop.f32.mrf.mxu0
    %v1506 = vadd.f32 %v1403, %v1505
    %1507 = vmatmul.bf16.gmra.mxu0 %v1466
    %v1508 = vpop.f32.mrf.mxu0
    %v1509 = vadd.f32 %v1404, %v1508
    %v1510 = vpop.f32.mrf.mxu0
    %v1511 = vadd.f32 %v1405, %v1510
    %1512 = vmatmul.bf16.gmra.mxu0 %v1469
    %v1513 = vpop.f32.mrf.mxu0
    %v1514 = vadd.f32 %v1406, %v1513
    %v1515 = vpop.f32.mrf.mxu0
    %v1516 = vadd.f32 %v1407, %v1515
    %1517 = vmatmul.bf16.gmra.mxu0 %v1472
    %v1518 = vpop.f32.mrf.mxu0
    %v1519 = vadd.f32 %v1408, %v1518
    %v1520 = vpop.f32.mrf.mxu0
    %v1521 = vadd.f32 %v1409, %v1520
    %1522 = vdwg.mxu0
    %1523 = vst [vmem:[#allocation15] sm:$0xff] %v1484
    %1524 = vst [vmem:[#allocation15 + $0x8] sm:$0xff] %v1486
    %1525 = vst [vmem:[#allocation15 + $0x10] sm:$0xff] %v1489
    %1526 = vst [vmem:[#allocation15 + $0x18] sm:$0xff] %v1491
    %1527 = vst [vmem:[#allocation15 + $0x20] sm:$0xff] %v1494
    %1528 = vst [vmem:[#allocation15 + $0x28] sm:$0xff] %v1496
    %1529 = vst [vmem:[#allocation15 + $0x30] sm:$0xff] %v1499
    %1530 = vst [vmem:[#allocation15 + $0x38] sm:$0xff] %v1501
    %1531 = vst [vmem:[#allocation15 + $0x40] sm:$0xff] %v1504
    %1532 = vst [vmem:[#allocation15 + $0x48] sm:$0xff] %v1506
    %1533 = vst [vmem:[#allocation15 + $0x50] sm:$0xff] %v1509
    %1534 = vst [vmem:[#allocation15 + $0x58] sm:$0xff] %v1511
    %1535 = vst [vmem:[#allocation15 + $0x60] sm:$0xff] %v1514
    %1536 = vst [vmem:[#allocation15 + $0x68] sm:$0xff] %v1516
    %1537 = vst [vmem:[#allocation15 + $0x70] sm:$0xff] %v1519
    %1538 = vst [vmem:[#allocation15 + $0x78] sm:$0xff] %v1521
    // Predicated region
    $region66: #{tpu_custom_call.1} parent=1 // pred_check
      _
    $region67: #{tpu_custom_call.1} parent=1 // pred_check_branch
      %1540 = sbr.rel (0) target = $region69
    $region68: #{tpu_custom_call.1} parent=1 // pred_region
      %1542 = vsyncadd [#allocation6], 0
      %s1543 = sshll.u32 [#allocation15], 4
      %s1544 = int_to_ptr.vmem [resolvable:$true] %s1543
      %s1545 = sshll.u32 %s10, 4
      %s1546 = int_to_ptr.hbm [resolvable:$true] %s1545
      %1551 = dma.vmem_to_hbm [thread:$0]  %s1544, 2048, %s1546, [#allocation6], 128, 128, 8
    $region69: #{tpu_custom_call.1} parent=1 // pred_fallthru
      _
    // Predicated region
    $region70: #{tpu_custom_call.1} parent=1 // pred_check
      _
    $region71: #{tpu_custom_call.1} parent=1 // pred_check_branch
      %1553 = sbr.rel (0) target = $region73
    $region72: #{tpu_custom_call.1} parent=1 // pred_region
      %1555 = dma.done [#allocation6], 2048
    $region73: #{tpu_custom_call.1} parent=1 // pred_fallthru
      _
    %1556 = vsyncpa [#allocation5], 1
    %1557 = vsyncpa [#allocation8], 1
    %1558 = vsyncpa [#allocation11], 1
    %1559 = vsyncpa [#allocation14], 1
    %1560 = vsyncpa [#allocation6], 1

</llo_original>
